<compile_context>
chip_gen: v7x
topology: tpu7x:2x2x1
jax: 0.10.0
libtpu: 0.0.40
codegen_flags: <defaults>
</compile_context>

<pallas_src>
import jax
import jax.numpy as jnp
from jax.experimental import pallas as pl
from jax.experimental.pallas import tpu as pltpu


# conv config mirrors nn.Sequential: (C_in, C_out, K, stride)
_CONV_CFG = [(1, 8, 32, 16), (8, 16, 16, 8), (16, 32, 8, 4),
             (32, 64, 4, 2), (64, 128, 4, 2)]

# conv2's window = 16 conv1 timesteps from group q plus (K2 - S2) from q+1.
_K2_EXTRA = _CONV_CFG[2][2] - _CONV_CFG[2][3]          # 8 - 4 = 4


# --------------------------------------------------------------------------
# wrapper-side weight preparation (pure layout plumbing, tiny arrays)
# --------------------------------------------------------------------------

def _window_conv_mat(w, stride, g, win=None):
    """Dense matrix of a windowed stride-`stride` valid conv.

    w: (C_out, C_in, K) torch-layout Conv1d weight.  Returns W of shape
    (win*C_in, g*C_out) such that, for an input window of `win` consecutive
    timesteps laid out as one row with columns ordered
    (time-in-window, channel),
        out_row = in_row @ W
    yields the g conv outputs whose strides start at the window origin, with
    columns ordered (time-in-group, out_channel).  Taps falling outside the
    window get zero weight (callers guarantee they are never needed).
    """
    c_out, c_in, k = w.shape
    if win is None:
        win = stride * g + (k - stride)
    j = jnp.arange(win)[:, None]               # (win, 1) input time in window
    m = jnp.arange(g)[None, :]                 # (1, g)   output phase
    tap = j - stride * m                       # (win, g)
    valid = (tap >= 0) & (tap < k)
    w_t = jnp.transpose(w, (2, 1, 0))          # (K, C_in, C_out)
    mat = w_t[jnp.clip(tap, 0, k - 1)]         # (win, g, C_in, C_out)
    mat = jnp.where(valid[:, :, None, None], mat, 0.0)
    # -> (win, C_in, g, C_out) -> (win*C_in, g*C_out)
    return mat.transpose(0, 2, 1, 3).reshape(win * c_in, g * c_out)


def _full_block(a):
    nd = a.ndim
    return pl.BlockSpec(a.shape, lambda i, _nd=nd: (0,) * _nd)


# --------------------------------------------------------------------------
# fused kernel: conv0..conv4 (+ReLU) + GRUCell step, all VMEM-resident
# --------------------------------------------------------------------------

def _net_fused_kernel(x2_ref, w0_ref, b0_ref, w1_ref, b1_ref, w2_ref, b2_ref,
                      w3_ref, b3_ref, w4_ref, b4_ref,
                      wih_ref, whh_ref, bih_ref, bhh_ref, hx_ref, out_ref):
    f32 = jnp.float32
    bf16 = jnp.bfloat16

    nh2 = x2_ref.shape[0]        # conv1 timesteps materialized (= 16 * n2)
    n2 = nh2 // 16               # conv1 timesteps grouped by 16
    n3 = n2 - 1                  # conv2 output rows (grouped by 4)
    n4 = n3 - 1                  # conv3 output rows (grouped by 2)
    t = n4 - 1                   # final number of frames

    def mm(a, b_ref):            # bf16 operands, f32 accumulation
        return jnp.dot(a.astype(bf16), b_ref[...], preferred_element_type=f32)

    # conv0 + conv1 (+ReLU).  Every row of x2 is a self-contained 272-sample
    # window in phase-major order (row r = j*n2 + q  <->  conv1 timestep
    # 16q + j), so each layer is a single full-width matmul (no band split)
    # and the 16-way decimation below is just contiguous static row slices.
    g1 = jnp.maximum(mm(x2_ref[...], w0_ref) + b0_ref[...], 0.0)   # (nh2,128)
    h2 = jnp.maximum(mm(g1, w1_ref) + b1_ref[...], 0.0)            # (nh2, 16)

    # conv2 (+ReLU): assemble the 20-timestep window (lane concat of
    # contiguous row slices of the phase-major h2) and do one matmul.
    parts = [h2[j * n2:j * n2 + n3, :] for j in range(16)]       # t = 16q + j
    parts += [h2[j * n2 + 1:j * n2 + n2, :]                      # t = 16(q+1)+j
              for j in range(_K2_EXTRA)]
    hwin = jnp.concatenate(parts, axis=1)                        # (n3, 320)
    g3 = jnp.maximum(mm(hwin, w2_ref) + b2_ref[...], 0.0)        # (n3, 128)

    # conv3 (+ReLU): the two weight bands are stacked host-side -> one K=256
    # dot on the lane-concatenated, row-shifted operand.
    c3 = jnp.concatenate([g3[0:n4], g3[1:n3]], axis=1)           # (n4, 256)
    g4 = jnp.maximum(mm(c3, w3_ref) + b3_ref[...], 0.0)          # (n4, 128)

    # conv4 (+ReLU): lane-dense (t, 128) activation for the GRU.
    c4 = jnp.concatenate([g4[0:t], g4[1:n4]], axis=1)            # (t, 256)
    y5 = jnp.maximum(mm(c4, w4_ref) + b4_ref[...], 0.0)          # (t, 128)

    # GRUCell(128 -> 1) on every timestep with the constant initial hx
    # (PyTorch gate order r, z, n).  The reference forward never writes the
    # result back to hx, so it does not feed the module output; it is still
    # computed faithfully and returned for validation.  Kept in f32.
    hx = hx_ref[...]                                             # (1, 1)
    gi = jnp.dot(y5, wih_ref[...], preferred_element_type=f32) + bih_ref[...]
    gh = hx * whh_ref[...] + bhh_ref[...]                        # (1, 3)
    r = jax.nn.sigmoid(gi[:, 0:1] + gh[:, 0:1])
    z = jax.nn.sigmoid(gi[:, 1:2] + gh[:, 1:2])
    n = jnp.tanh(gi[:, 2:3] + r * gh[:, 2:3])
    gru = (1.0 - z) * n + z * hx                                 # (t, 1)

    # Single lane-dense store: cols [0,128) = y5, cols [128,256) = the GRU
    # result broadcast along lanes (the wrapper slices column 128 back out).
    out_ref[...] = jnp.concatenate(
        [y5, jnp.broadcast_to(gru, (t, 128))], axis=1)


# --------------------------------------------------------------------------
# wrappers
# --------------------------------------------------------------------------

def init_params(key):
    params = {}
    keys = jax.random.split(key, 2 * len(_CONV_CFG) + 5)
    ki = iter(range(len(keys)))
    for i, (cin, cout, k, _s) in enumerate(_CONV_CFG):
        bound = 1.0 / float(cin * k) ** 0.5
        params[f"conv{i}_w"] = jax.random.uniform(
            keys[next(ki)], (cout, cin, k), jnp.float32, -bound, bound)
        params[f"conv{i}_b"] = jax.random.uniform(
            keys[next(ki)], (cout,), jnp.float32, -bound, bound)
    hid, inp = 1, 128
    bound = 1.0 / float(hid) ** 0.5
    params["gru_w_ih"] = jax.random.uniform(keys[next(ki)], (3 * hid, inp),
                                            jnp.float32, -bound, bound)
    params["gru_w_hh"] = jax.random.uniform(keys[next(ki)], (3 * hid, hid),
                                            jnp.float32, -bound, bound)
    params["gru_b_ih"] = jax.random.uniform(keys[next(ki)], (3 * hid,),
                                            jnp.float32, -bound, bound)
    params["gru_b_hh"] = jax.random.uniform(keys[next(ki)], (3 * hid,),
                                            jnp.float32, -bound, bound)
    # torch.randn(1, 1) in the reference forward, made deterministic here.
    # TODO(synk): the reference draws a fresh hx per forward; here it is a
    # fixed parameter so the run is reproducible.
    params["hx"] = jax.random.normal(keys[next(ki)], (1, 1), jnp.float32)
    return params


def net_forward(params, x):
    """x: (1, 1, L) (NCL, batch 1 -- the reference uses an hx of shape (1,1))."""
    L = x.shape[-1]
    l_out = L
    for (_ci, _co, k, s) in _CONV_CFG:
        l_out = (l_out - k) // s + 1
    t = l_out
    assert t >= 8, "need >= 8 output frames for output[-8:].reshape(-1, 8)"

    # Row budget: n2 groups of 16 conv1 timesteps cover everything the t valid
    # output frames reach; the few trailing rows read zero-padded input and
    # are never consumed by valid results.
    n2 = t + 3
    nh2 = 16 * n2
    # Receptive field per conv1 timestep: 16 conv0 timesteps; per conv0
    # window: 16*16 + (32-16) = 272 raw samples.
    win1 = _CONV_CFG[1][2]                                          # 16
    win0 = _CONV_CFG[0][3] * win1 + (_CONV_CFG[0][2] - _CONV_CFG[0][3])  # 272

    raw_needed = 128 * (nh2 - 1) + win0
    x_pad = jnp.pad(x.reshape(-1), (0, raw_needed - L))

    # Phase-major row order r = j*n2 + q  <->  conv1 timestep p = 16q + j;
    # each row carries its full 272-sample receptive field (wrapper-side
    # layout plumbing, ~0.1 MB).
    p_perm = (16 * jnp.arange(n2)[None, :]
              + jnp.arange(16)[:, None]).reshape(-1)                # (nh2,)
    idx = 128 * p_perm[:, None] + jnp.arange(win0)[None, :]
    x2 = x_pad[idx].astype(jnp.bfloat16)                            # (nh2, 272)

    bf16 = jnp.bfloat16
    w0 = _window_conv_mat(params["conv0_w"], 16, 16).astype(bf16)   # (272,128)
    w1 = _window_conv_mat(params["conv1_w"], 8, 1).astype(bf16)     # (128, 16)
    w2 = _window_conv_mat(params["conv2_w"], 4, 4).astype(bf16)     # (320,128)
    w3 = _window_conv_mat(params["conv3_w"], 2, 2, win=8).astype(bf16)  # (256,128)
    w4 = _window_conv_mat(params["conv4_w"], 2, 1).astype(bf16)     # (256,128)
    b0g = jnp.tile(params["conv0_b"], 16)[None, :]                  # (1, 128)
    b1g = params["conv1_b"][None, :]                                # (1, 16)
    b2g = jnp.tile(params["conv2_b"], 4)[None, :]                   # (1, 128)
    b3g = jnp.tile(params["conv3_b"], 2)[None, :]                   # (1, 128)
    b4g = params["conv4_b"][None, :]                                # (1, 128)
    wih_t = params["gru_w_ih"].T                                    # (128, 3)
    whh_t = params["gru_w_hh"].T                                    # (1, 3)
    bih = params["gru_b_ih"][None, :]
    bhh = params["gru_b_hh"][None, :]
    hx = params["hx"]                                               # (1, 1)

    args = (x2, w0, b0g, w1, b1g, w2, b2g, w3, b3g, w4, b4g,
            wih_t, whh_t, bih, bhh, hx)

    out = pl.pallas_call(
        _net_fused_kernel,
        out_shape=jax.ShapeDtypeStruct((t, 256), jnp.float32),
        grid=(1,),
        in_specs=[_full_block(a) for a in args],
        out_specs=pl.BlockSpec((t, 256), lambda i: (0, 0)),
        compiler_params=pltpu.CompilerParams(
            dimension_semantics=("arbitrary",)),
    )(*args)

    y5 = out[:, :128]                                   # (t, 128) conv stack
    gru_h = out[:, 128:129]                             # (t, 1)   GRU result
    # Module output: the GRUCell result is never assigned back to hx in the
    # reference forward, so the returned tensor is just the initial hx
    # repeated (last 8 of T copies, reshaped to (1, 8)).
    result = jnp.broadcast_to(params["hx"], (1, 8))
    return result, gru_h, y5


# --------------------------------------------------------------------------
# pure-JAX reference (for numerical validation of the fused kernel)
# --------------------------------------------------------------------------

def _ref_forward(params, x):
    h = x[0]                                                  # (1, L)
    for i, (cin, cout, k, s) in enumerate(_CONV_CFG):
        w = params[f"conv{i}_w"]
        b = params[f"conv{i}_b"]
        l_in = h.shape[1]
        l_out = (l_in - k) // s + 1
        idx = jnp.arange(l_out)[:, None] * s + jnp.arange(k)[None, :]
        patches = h[:, idx]                                   # (cin, l_out, k)
        out = jnp.einsum("clk,ock->lo", patches, w,
                         precision=jax.lax.Precision.HIGHEST) + b[None, :]
        h = jnp.maximum(out, 0.0).T                           # (cout, l_out)
    y5 = h.T                                                  # (T, 128)
    gi = y5 @ params["gru_w_ih"].T + params["gru_b_ih"][None, :]
    gh = params["hx"] @ params["gru_w_hh"].T + params["gru_b_hh"][None, :]
    r = jax.nn.sigmoid(gi[:, 0:1] + gh[:, 0:1])
    z = jax.nn.sigmoid(gi[:, 1:2] + gh[:, 1:2])
    n = jnp.tanh(gi[:, 2:3] + r * gh[:, 2:3])
    gru = (1.0 - z) * n + z * params["hx"]
    return y5, gru


if __name__ == "__main__":
    # Smallest input length giving exactly T = 8 frames, as required by the
    # reference forward's `output[-8:].reshape(-1, 8)`.
    L = 20112
    x = jax.random.normal(jax.random.PRNGKey(0), (1, 1, L), dtype=jnp.float32)
    params = init_params(jax.random.PRNGKey(1))

    fwd = jax.jit(net_forward)
    result, gru_h, y5 = jax.block_until_ready(fwd(params, x))

    assert result.shape == (1, 8), result.shape
    # The module output is the initial hx repeated (GRU result never assigned).
    assert bool(jnp.all(result == params["hx"][0, 0]))

    # Validate the fused conv stack + GRU against a pure-JAX f32 reference.
    # Tolerances account for bf16 matmul operands in the kernel; real layout /
    # index bugs would produce O(1) errors and still be caught.
    y5_ref, gru_ref = _ref_forward(params, x)
    err_y5 = float(jnp.linalg.norm(y5 - y5_ref) /
                   (jnp.linalg.norm(y5_ref) + 1e-12))
    err_gru = float(jnp.linalg.norm(gru_h - gru_ref) /
                    (jnp.linalg.norm(gru_ref) + 1e-12))
    assert err_y5 < 5e-2, err_y5
    assert err_gru < 1e-1, err_gru

    print("KERNEL_OK")
</pallas_src>

<mosaic_0001>
module attributes {stable_mosaic.version = 11 : i64} {
  func.func @_net_fused_kernel(%arg0: i32, %arg1: memref<176x272xbf16, #tpu.memory_space<vmem>>, %arg2: memref<272x128xbf16, #tpu.memory_space<vmem>>, %arg3: memref<1x128xf32, #tpu.memory_space<vmem>>, %arg4: memref<128x16xbf16, #tpu.memory_space<vmem>>, %arg5: memref<1x16xf32, #tpu.memory_space<vmem>>, %arg6: memref<320x128xbf16, #tpu.memory_space<vmem>>, %arg7: memref<1x128xf32, #tpu.memory_space<vmem>>, %arg8: memref<256x128xbf16, #tpu.memory_space<vmem>>, %arg9: memref<1x128xf32, #tpu.memory_space<vmem>>, %arg10: memref<256x128xbf16, #tpu.memory_space<vmem>>, %arg11: memref<1x128xf32, #tpu.memory_space<vmem>>, %arg12: memref<128x3xf32, #tpu.memory_space<vmem>>, %arg13: memref<1x3xf32, #tpu.memory_space<vmem>>, %arg14: memref<1x3xf32, #tpu.memory_space<vmem>>, %arg15: memref<1x3xf32, #tpu.memory_space<vmem>>, %arg16: memref<1x1xf32, #tpu.memory_space<vmem>>, %arg17: memref<8x256xf32, #tpu.memory_space<vmem>>) attributes {dimension_semantics = [#tpu.dimension_semantics<arbitrary>], iteration_bounds = array<i64: 1>, scalar_prefetch = 0 : i64, scratch_operands = 0 : i64, tpu.core_type = #tpu.core_type<tc>, window_params = [{pipeline_mode = #tpu.pipeline_mode<synchronous>, transform_indices = @transform_0, window_bounds = array<i64: 176, 272>}, {pipeline_mode = #tpu.pipeline_mode<synchronous>, transform_indices = @transform_1, window_bounds = array<i64: 272, 128>}, {pipeline_mode = #tpu.pipeline_mode<synchronous>, transform_indices = @transform_2, window_bounds = array<i64: 1, 128>}, {pipeline_mode = #tpu.pipeline_mode<synchronous>, transform_indices = @transform_3, window_bounds = array<i64: 128, 16>}, {pipeline_mode = #tpu.pipeline_mode<synchronous>, transform_indices = @transform_4, window_bounds = array<i64: 1, 16>}, {pipeline_mode = #tpu.pipeline_mode<synchronous>, transform_indices = @transform_5, window_bounds = array<i64: 320, 128>}, {pipeline_mode = #tpu.pipeline_mode<synchronous>, transform_indices = @transform_6, window_bounds = array<i64: 1, 128>}, {pipeline_mode = #tpu.pipeline_mode<synchronous>, transform_indices = @transform_7, window_bounds = array<i64: 256, 128>}, {pipeline_mode = #tpu.pipeline_mode<synchronous>, transform_indices = @transform_8, window_bounds = array<i64: 1, 128>}, {pipeline_mode = #tpu.pipeline_mode<synchronous>, transform_indices = @transform_9, window_bounds = array<i64: 256, 128>}, {pipeline_mode = #tpu.pipeline_mode<synchronous>, transform_indices = @transform_10, window_bounds = array<i64: 1, 128>}, {pipeline_mode = #tpu.pipeline_mode<synchronous>, transform_indices = @transform_11, window_bounds = array<i64: 128, 3>}, {pipeline_mode = #tpu.pipeline_mode<synchronous>, transform_indices = @transform_12, window_bounds = array<i64: 1, 3>}, {pipeline_mode = #tpu.pipeline_mode<synchronous>, transform_indices = @transform_13, window_bounds = array<i64: 1, 3>}, {pipeline_mode = #tpu.pipeline_mode<synchronous>, transform_indices = @transform_14, window_bounds = array<i64: 1, 3>}, {pipeline_mode = #tpu.pipeline_mode<synchronous>, transform_indices = @transform_15, window_bounds = array<i64: 1, 1>}, {pipeline_mode = #tpu.pipeline_mode<synchronous>, transform_indices = @transform_16, window_bounds = array<i64: 8, 256>}]} {
    %c0 = arith.constant 0 : index
    %c0_0 = arith.constant 0 : index
    %0 = vector.load %arg1[%c0, %c0_0] : memref<176x272xbf16, #tpu.memory_space<vmem>>, vector<176x272xbf16>
    %c0_1 = arith.constant 0 : index
    %c0_2 = arith.constant 0 : index
    %1 = vector.load %arg2[%c0_1, %c0_2] : memref<272x128xbf16, #tpu.memory_space<vmem>>, vector<272x128xbf16>
    %cst = arith.constant dense<0.000000e+00> : vector<176x128xf32>
    %2 = tpu.matmul %0, %1, %cst {dimension_numbers = #tpu.dot_dimension_numbers<[1], [0], [0], [1], [0, 0, 1, 1], [], []>} : vector<176x272xbf16>, vector<272x128xbf16>, vector<176x128xf32> -> vector<176x128xf32>
    %c0_3 = arith.constant 0 : index
    %c0_4 = arith.constant 0 : index
    %3 = vector.load %arg3[%c0_3, %c0_4] : memref<1x128xf32, #tpu.memory_space<vmem>>, vector<1x128xf32>
    %4 = vector.broadcast %3 : vector<1x128xf32> to vector<176x128xf32>
    %5 = arith.addf %2, %4 : vector<176x128xf32>
    %cst_5 = arith.constant 0.000000e+00 : f32
    %6 = vector.broadcast %cst_5 : f32 to vector<176x128xf32>
    %7 = arith.maximumf %5, %6 : vector<176x128xf32>
    %8 = arith.truncf %7 : vector<176x128xf32> to vector<176x128xbf16>
    %c0_6 = arith.constant 0 : index
    %c0_7 = arith.constant 0 : index
    %9 = vector.load %arg4[%c0_6, %c0_7] : memref<128x16xbf16, #tpu.memory_space<vmem>>, vector<128x16xbf16>
    %cst_8 = arith.constant dense<0.000000e+00> : vector<176x16xf32>
    %10 = tpu.matmul %8, %9, %cst_8 {dimension_numbers = #tpu.dot_dimension_numbers<[1], [0], [0], [1], [0, 0, 1, 1], [], []>} : vector<176x128xbf16>, vector<128x16xbf16>, vector<176x16xf32> -> vector<176x16xf32>
    %c0_9 = arith.constant 0 : index
    %c0_10 = arith.constant 0 : index
    %11 = vector.load %arg5[%c0_9, %c0_10] : memref<1x16xf32, #tpu.memory_space<vmem>>, vector<1x16xf32>
    %12 = vector.broadcast %11 : vector<1x16xf32> to vector<176x16xf32>
    %13 = arith.addf %10, %12 : vector<176x16xf32>
    %cst_11 = arith.constant 0.000000e+00 : f32
    %14 = vector.broadcast %cst_11 : f32 to vector<176x16xf32>
    %15 = arith.maximumf %13, %14 : vector<176x16xf32>
    %16 = vector.extract_strided_slice %15 {offsets = [0, 0], sizes = [10, 16], strides = [1, 1]} : vector<176x16xf32> to vector<10x16xf32>
    %17 = vector.extract_strided_slice %15 {offsets = [11, 0], sizes = [10, 16], strides = [1, 1]} : vector<176x16xf32> to vector<10x16xf32>
    %18 = vector.extract_strided_slice %15 {offsets = [22, 0], sizes = [10, 16], strides = [1, 1]} : vector<176x16xf32> to vector<10x16xf32>
    %19 = vector.extract_strided_slice %15 {offsets = [33, 0], sizes = [10, 16], strides = [1, 1]} : vector<176x16xf32> to vector<10x16xf32>
    %20 = vector.extract_strided_slice %15 {offsets = [44, 0], sizes = [10, 16], strides = [1, 1]} : vector<176x16xf32> to vector<10x16xf32>
    %21 = vector.extract_strided_slice %15 {offsets = [55, 0], sizes = [10, 16], strides = [1, 1]} : vector<176x16xf32> to vector<10x16xf32>
    %22 = vector.extract_strided_slice %15 {offsets = [66, 0], sizes = [10, 16], strides = [1, 1]} : vector<176x16xf32> to vector<10x16xf32>
    %23 = vector.extract_strided_slice %15 {offsets = [77, 0], sizes = [10, 16], strides = [1, 1]} : vector<176x16xf32> to vector<10x16xf32>
    %24 = vector.extract_strided_slice %15 {offsets = [88, 0], sizes = [10, 16], strides = [1, 1]} : vector<176x16xf32> to vector<10x16xf32>
    %25 = vector.extract_strided_slice %15 {offsets = [99, 0], sizes = [10, 16], strides = [1, 1]} : vector<176x16xf32> to vector<10x16xf32>
    %26 = vector.extract_strided_slice %15 {offsets = [110, 0], sizes = [10, 16], strides = [1, 1]} : vector<176x16xf32> to vector<10x16xf32>
    %27 = vector.extract_strided_slice %15 {offsets = [121, 0], sizes = [10, 16], strides = [1, 1]} : vector<176x16xf32> to vector<10x16xf32>
    %28 = vector.extract_strided_slice %15 {offsets = [132, 0], sizes = [10, 16], strides = [1, 1]} : vector<176x16xf32> to vector<10x16xf32>
    %29 = vector.extract_strided_slice %15 {offsets = [143, 0], sizes = [10, 16], strides = [1, 1]} : vector<176x16xf32> to vector<10x16xf32>
    %30 = vector.extract_strided_slice %15 {offsets = [154, 0], sizes = [10, 16], strides = [1, 1]} : vector<176x16xf32> to vector<10x16xf32>
    %31 = vector.extract_strided_slice %15 {offsets = [165, 0], sizes = [10, 16], strides = [1, 1]} : vector<176x16xf32> to vector<10x16xf32>
    %32 = vector.extract_strided_slice %15 {offsets = [1, 0], sizes = [10, 16], strides = [1, 1]} : vector<176x16xf32> to vector<10x16xf32>
    %33 = vector.extract_strided_slice %15 {offsets = [12, 0], sizes = [10, 16], strides = [1, 1]} : vector<176x16xf32> to vector<10x16xf32>
    %34 = vector.extract_strided_slice %15 {offsets = [23, 0], sizes = [10, 16], strides = [1, 1]} : vector<176x16xf32> to vector<10x16xf32>
    %35 = vector.extract_strided_slice %15 {offsets = [34, 0], sizes = [10, 16], strides = [1, 1]} : vector<176x16xf32> to vector<10x16xf32>
    %36 = tpu.concatenate %16, %17, %18, %19, %20, %21, %22, %23, %24, %25, %26, %27, %28, %29, %30, %31 in 1 : vector<10x16xf32>, vector<10x16xf32>, vector<10x16xf32>, vector<10x16xf32>, vector<10x16xf32>, vector<10x16xf32>, vector<10x16xf32>, vector<10x16xf32>, vector<10x16xf32>, vector<10x16xf32>, vector<10x16xf32>, vector<10x16xf32>, vector<10x16xf32>, vector<10x16xf32>, vector<10x16xf32>, vector<10x16xf32> -> vector<10x256xf32>
    %37 = tpu.concatenate %32, %33, %34, %35 in 1 : vector<10x16xf32>, vector<10x16xf32>, vector<10x16xf32>, vector<10x16xf32> -> vector<10x64xf32>
    %38 = tpu.concatenate %36, %37 in 1 : vector<10x256xf32>, vector<10x64xf32> -> vector<10x320xf32>
    %39 = arith.truncf %38 : vector<10x320xf32> to vector<10x320xbf16>
    %c0_12 = arith.constant 0 : index
    %c0_13 = arith.constant 0 : index
    %40 = vector.load %arg6[%c0_12, %c0_13] : memref<320x128xbf16, #tpu.memory_space<vmem>>, vector<320x128xbf16>
    %cst_14 = arith.constant dense<0.000000e+00> : vector<10x128xf32>
    %41 = tpu.matmul %39, %40, %cst_14 {dimension_numbers = #tpu.dot_dimension_numbers<[1], [0], [0], [1], [0, 0, 1, 1], [], []>} : vector<10x320xbf16>, vector<320x128xbf16>, vector<10x128xf32> -> vector<10x128xf32>
    %c0_15 = arith.constant 0 : index
    %c0_16 = arith.constant 0 : index
    %42 = vector.load %arg7[%c0_15, %c0_16] : memref<1x128xf32, #tpu.memory_space<vmem>>, vector<1x128xf32>
    %43 = vector.broadcast %42 : vector<1x128xf32> to vector<10x128xf32>
    %44 = arith.addf %41, %43 : vector<10x128xf32>
    %cst_17 = arith.constant 0.000000e+00 : f32
    %45 = vector.broadcast %cst_17 : f32 to vector<10x128xf32>
    %46 = arith.maximumf %44, %45 : vector<10x128xf32>
    %47 = vector.extract_strided_slice %46 {offsets = [0, 0], sizes = [9, 128], strides = [1, 1]} : vector<10x128xf32> to vector<9x128xf32>
    %48 = vector.extract_strided_slice %46 {offsets = [1, 0], sizes = [9, 128], strides = [1, 1]} : vector<10x128xf32> to vector<9x128xf32>
    %49 = tpu.concatenate %47, %48 in 1 : vector<9x128xf32>, vector<9x128xf32> -> vector<9x256xf32>
    %50 = arith.truncf %49 : vector<9x256xf32> to vector<9x256xbf16>
    %c0_18 = arith.constant 0 : index
    %c0_19 = arith.constant 0 : index
    %51 = vector.load %arg8[%c0_18, %c0_19] : memref<256x128xbf16, #tpu.memory_space<vmem>>, vector<256x128xbf16>
    %cst_20 = arith.constant dense<0.000000e+00> : vector<9x128xf32>
    %52 = tpu.matmul %50, %51, %cst_20 {dimension_numbers = #tpu.dot_dimension_numbers<[1], [0], [0], [1], [0, 0, 1, 1], [], []>} : vector<9x256xbf16>, vector<256x128xbf16>, vector<9x128xf32> -> vector<9x128xf32>
    %c0_21 = arith.constant 0 : index
    %c0_22 = arith.constant 0 : index
    %53 = vector.load %arg9[%c0_21, %c0_22] : memref<1x128xf32, #tpu.memory_space<vmem>>, vector<1x128xf32>
    %54 = vector.broadcast %53 : vector<1x128xf32> to vector<9x128xf32>
    %55 = arith.addf %52, %54 : vector<9x128xf32>
    %cst_23 = arith.constant 0.000000e+00 : f32
    %56 = vector.broadcast %cst_23 : f32 to vector<9x128xf32>
    %57 = arith.maximumf %55, %56 : vector<9x128xf32>
    %58 = vector.extract_strided_slice %57 {offsets = [0, 0], sizes = [8, 128], strides = [1, 1]} : vector<9x128xf32> to vector<8x128xf32>
    %59 = vector.extract_strided_slice %57 {offsets = [1, 0], sizes = [8, 128], strides = [1, 1]} : vector<9x128xf32> to vector<8x128xf32>
    %60 = tpu.concatenate %58, %59 in 1 : vector<8x128xf32>, vector<8x128xf32> -> vector<8x256xf32>
    %61 = arith.truncf %60 : vector<8x256xf32> to vector<8x256xbf16>
    %c0_24 = arith.constant 0 : index
    %c0_25 = arith.constant 0 : index
    %62 = vector.load %arg10[%c0_24, %c0_25] : memref<256x128xbf16, #tpu.memory_space<vmem>>, vector<256x128xbf16>
    %cst_26 = arith.constant dense<0.000000e+00> : vector<8x128xf32>
    %63 = tpu.matmul %61, %62, %cst_26 {dimension_numbers = #tpu.dot_dimension_numbers<[1], [0], [0], [1], [0, 0, 1, 1], [], []>} : vector<8x256xbf16>, vector<256x128xbf16>, vector<8x128xf32> -> vector<8x128xf32>
    %c0_27 = arith.constant 0 : index
    %c0_28 = arith.constant 0 : index
    %64 = vector.load %arg11[%c0_27, %c0_28] : memref<1x128xf32, #tpu.memory_space<vmem>>, vector<1x128xf32>
    %65 = vector.broadcast %64 : vector<1x128xf32> to vector<8x128xf32>
    %66 = arith.addf %63, %65 : vector<8x128xf32>
    %cst_29 = arith.constant 0.000000e+00 : f32
    %67 = vector.broadcast %cst_29 : f32 to vector<8x128xf32>
    %68 = arith.maximumf %66, %67 : vector<8x128xf32>
    %c0_30 = arith.constant 0 : index
    %c0_31 = arith.constant 0 : index
    %69 = vector.load %arg16[%c0_30, %c0_31] : memref<1x1xf32, #tpu.memory_space<vmem>>, vector<1x1xf32>
    %c0_32 = arith.constant 0 : index
    %c0_33 = arith.constant 0 : index
    %70 = vector.load %arg12[%c0_32, %c0_33] : memref<128x3xf32, #tpu.memory_space<vmem>>, vector<128x3xf32>
    %cst_34 = arith.constant dense<0.000000e+00> : vector<8x3xf32>
    %71 = tpu.matmul %68, %70, %cst_34 {dimension_numbers = #tpu.dot_dimension_numbers<[1], [0], [0], [1], [0, 0, 1, 1], [], []>} : vector<8x128xf32>, vector<128x3xf32>, vector<8x3xf32> -> vector<8x3xf32>
    %c0_35 = arith.constant 0 : index
    %c0_36 = arith.constant 0 : index
    %72 = vector.load %arg14[%c0_35, %c0_36] : memref<1x3xf32, #tpu.memory_space<vmem>>, vector<1x3xf32>
    %73 = vector.broadcast %72 : vector<1x3xf32> to vector<8x3xf32>
    %74 = arith.addf %71, %73 : vector<8x3xf32>
    %c0_37 = arith.constant 0 : index
    %c0_38 = arith.constant 0 : index
    %75 = vector.load %arg13[%c0_37, %c0_38] : memref<1x3xf32, #tpu.memory_space<vmem>>, vector<1x3xf32>
    %76 = vector.broadcast %69 : vector<1x1xf32> to vector<1x3xf32>
    %77 = arith.mulf %76, %75 : vector<1x3xf32>
    %c0_39 = arith.constant 0 : index
    %c0_40 = arith.constant 0 : index
    %78 = vector.load %arg15[%c0_39, %c0_40] : memref<1x3xf32, #tpu.memory_space<vmem>>, vector<1x3xf32>
    %79 = arith.addf %77, %78 : vector<1x3xf32>
    %80 = vector.extract_strided_slice %74 {offsets = [0, 0], sizes = [8, 1], strides = [1, 1]} : vector<8x3xf32> to vector<8x1xf32>
    %81 = vector.extract_strided_slice %79 {offsets = [0, 0], sizes = [1, 1], strides = [1, 1]} : vector<1x3xf32> to vector<1x1xf32>
    %82 = vector.broadcast %81 : vector<1x1xf32> to vector<8x1xf32>
    %83 = arith.addf %80, %82 : vector<8x1xf32>
    %84 = arith.negf %83 : vector<8x1xf32>
    %85 = math.exp %84 : vector<8x1xf32>
    %cst_41 = arith.constant 1.000000e+00 : f32
    %86 = vector.broadcast %cst_41 : f32 to vector<8x1xf32>
    %87 = arith.addf %86, %85 : vector<8x1xf32>
    %88 = arith.divf %86, %87 : vector<8x1xf32>
    %89 = vector.extract_strided_slice %74 {offsets = [0, 1], sizes = [8, 1], strides = [1, 1]} : vector<8x3xf32> to vector<8x1xf32>
    %90 = vector.extract_strided_slice %79 {offsets = [0, 1], sizes = [1, 1], strides = [1, 1]} : vector<1x3xf32> to vector<1x1xf32>
    %91 = vector.broadcast %90 : vector<1x1xf32> to vector<8x1xf32>
    %92 = arith.addf %89, %91 : vector<8x1xf32>
    %93 = arith.negf %92 : vector<8x1xf32>
    %94 = math.exp %93 : vector<8x1xf32>
    %cst_42 = arith.constant 1.000000e+00 : f32
    %95 = vector.broadcast %cst_42 : f32 to vector<8x1xf32>
    %96 = arith.addf %95, %94 : vector<8x1xf32>
    %97 = arith.divf %95, %96 : vector<8x1xf32>
    %98 = vector.extract_strided_slice %74 {offsets = [0, 2], sizes = [8, 1], strides = [1, 1]} : vector<8x3xf32> to vector<8x1xf32>
    %99 = vector.extract_strided_slice %79 {offsets = [0, 2], sizes = [1, 1], strides = [1, 1]} : vector<1x3xf32> to vector<1x1xf32>
    %100 = vector.broadcast %99 : vector<1x1xf32> to vector<8x1xf32>
    %101 = arith.mulf %88, %100 : vector<8x1xf32>
    %102 = arith.addf %98, %101 : vector<8x1xf32>
    %103 = math.tanh %102 : vector<8x1xf32>
    %cst_43 = arith.constant 1.000000e+00 : f32
    %104 = vector.broadcast %cst_43 : f32 to vector<8x1xf32>
    %105 = arith.subf %104, %97 : vector<8x1xf32>
    %106 = arith.mulf %105, %103 : vector<8x1xf32>
    %107 = vector.broadcast %69 : vector<1x1xf32> to vector<8x1xf32>
    %108 = arith.mulf %97, %107 : vector<8x1xf32>
    %109 = arith.addf %106, %108 : vector<8x1xf32>
    %110 = vector.shape_cast %109 : vector<8x1xf32> to vector<8x1xf32>
    %111 = vector.broadcast %110 : vector<8x1xf32> to vector<8x128xf32>
    %112 = tpu.concatenate %68, %111 in 1 : vector<8x128xf32>, vector<8x128xf32> -> vector<8x256xf32>
    %c0_44 = arith.constant 0 : index
    %c0_45 = arith.constant 0 : index
    %113 = vector.load %arg17[%c0_44, %c0_45] : memref<8x256xf32, #tpu.memory_space<vmem>>, vector<8x256xf32>
    tpu.vector_store %arg17[%c0_44, %c0_45], %112 {strides = array<i32>} : memref<8x256xf32, #tpu.memory_space<vmem>>, vector<8x256xf32>,
    return
  }
  func.func @transform_0(%arg0: i32) -> (i32, i32) {
    %c0_i32 = arith.constant 0 : i32
    %c0_i32_0 = arith.constant 0 : i32
    %c0_i32_1 = arith.constant 0 : i32
    return %c0_i32, %c0_i32_0 : i32, i32
  }
  func.func @transform_1(%arg0: i32) -> (i32, i32) {
    %c0_i32 = arith.constant 0 : i32
    %c0_i32_0 = arith.constant 0 : i32
    %c0_i32_1 = arith.constant 0 : i32
    return %c0_i32, %c0_i32_0 : i32, i32
  }
  func.func @transform_2(%arg0: i32) -> (i32, i32) {
    %c0_i32 = arith.constant 0 : i32
    %c0_i32_0 = arith.constant 0 : i32
    %c0_i32_1 = arith.constant 0 : i32
    return %c0_i32, %c0_i32_0 : i32, i32
  }
  func.func @transform_3(%arg0: i32) -> (i32, i32) {
    %c0_i32 = arith.constant 0 : i32
    %c0_i32_0 = arith.constant 0 : i32
    %c0_i32_1 = arith.constant 0 : i32
    return %c0_i32, %c0_i32_0 : i32, i32
  }
  func.func @transform_4(%arg0: i32) -> (i32, i32) {
    %c0_i32 = arith.constant 0 : i32
    %c0_i32_0 = arith.constant 0 : i32
    %c0_i32_1 = arith.constant 0 : i32
    return %c0_i32, %c0_i32_0 : i32, i32
  }
  func.func @transform_5(%arg0: i32) -> (i32, i32) {
    %c0_i32 = arith.constant 0 : i32
    %c0_i32_0 = arith.constant 0 : i32
    %c0_i32_1 = arith.constant 0 : i32
    return %c0_i32, %c0_i32_0 : i32, i32
  }
  func.func @transform_6(%arg0: i32) -> (i32, i32) {
    %c0_i32 = arith.constant 0 : i32
    %c0_i32_0 = arith.constant 0 : i32
    %c0_i32_1 = arith.constant 0 : i32
    return %c0_i32, %c0_i32_0 : i32, i32
  }
  func.func @transform_7(%arg0: i32) -> (i32, i32) {
    %c0_i32 = arith.constant 0 : i32
    %c0_i32_0 = arith.constant 0 : i32
    %c0_i32_1 = arith.constant 0 : i32
    return %c0_i32, %c0_i32_0 : i32, i32
  }
  func.func @transform_8(%arg0: i32) -> (i32, i32) {
    %c0_i32 = arith.constant 0 : i32
    %c0_i32_0 = arith.constant 0 : i32
    %c0_i32_1 = arith.constant 0 : i32
    return %c0_i32, %c0_i32_0 : i32, i32
  }
  func.func @transform_9(%arg0: i32) -> (i32, i32) {
    %c0_i32 = arith.constant 0 : i32
    %c0_i32_0 = arith.constant 0 : i32
    %c0_i32_1 = arith.constant 0 : i32
    return %c0_i32, %c0_i32_0 : i32, i32
  }
  func.func @transform_10(%arg0: i32) -> (i32, i32) {
    %c0_i32 = arith.constant 0 : i32
    %c0_i32_0 = arith.constant 0 : i32
    %c0_i32_1 = arith.constant 0 : i32
    return %c0_i32, %c0_i32_0 : i32, i32
  }
  func.func @transform_11(%arg0: i32) -> (i32, i32) {
    %c0_i32 = arith.constant 0 : i32
    %c0_i32_0 = arith.constant 0 : i32
    %c0_i32_1 = arith.constant 0 : i32
    return %c0_i32, %c0_i32_0 : i32, i32
  }
  func.func @transform_12(%arg0: i32) -> (i32, i32) {
    %c0_i32 = arith.constant 0 : i32
    %c0_i32_0 = arith.constant 0 : i32
    %c0_i32_1 = arith.constant 0 : i32
    return %c0_i32, %c0_i32_0 : i32, i32
  }
  func.func @transform_13(%arg0: i32) -> (i32, i32) {
    %c0_i32 = arith.constant 0 : i32
    %c0_i32_0 = arith.constant 0 : i32
    %c0_i32_1 = arith.constant 0 : i32
    return %c0_i32, %c0_i32_0 : i32, i32
  }
  func.func @transform_14(%arg0: i32) -> (i32, i32) {
    %c0_i32 = arith.constant 0 : i32
    %c0_i32_0 = arith.constant 0 : i32
    %c0_i32_1 = arith.constant 0 : i32
    return %c0_i32, %c0_i32_0 : i32, i32
  }
  func.func @transform_15(%arg0: i32) -> (i32, i32) {
    %c0_i32 = arith.constant 0 : i32
    %c0_i32_0 = arith.constant 0 : i32
    %c0_i32_1 = arith.constant 0 : i32
    return %c0_i32, %c0_i32_0 : i32, i32
  }
  func.func @transform_16(%arg0: i32) -> (i32, i32) {
    %c0_i32 = arith.constant 0 : i32
    %c0_i32_0 = arith.constant 0 : i32
    %c0_i32_1 = arith.constant 0 : i32
    return %c0_i32, %c0_i32_0 : i32, i32
  }
}

</mosaic_0001>

<llo_original>
// kernel: tile.18
$region0: #{tile.18}
  #allocation0 [shape = 's32[1]{0}', space=sflag, size = 0x4, scoped, tag = 'scoped memory for tile.18']
  %s0 = inlined_call_operand.vmem [shape: f32[8], index: 0, kind: input, shape index: {}]
  %s1 = inlined_call_operand.vmem [shape: f32[16,8], index: 1, kind: output, shape index: {}]
  // Predicated region
  $region2: #{tile.18} parent=0 // pred_check
    _
  $region3: #{tile.18} parent=0 // pred_check_branch
    %3 = sbr.rel (0) target = $region5
  $region4: #{tile.18} parent=0 // pred_region
    _
  $region5: #{tile.18} parent=0 // pred_fallthru
    _
  %v4 = vld [vmem:[%s0] ss:$0 sm:$0xff]
  %5 = vst [vmem:[%s1] sm:$0xff] %v4
  %s6 = scalar_lea.vmem %s1, 8
  %7 = vst [vmem:[%s6] sm:$0xff] %v4

// kernel: tile.23
$region0: #{tile.23}
  #allocation0 [shape = 's32[1]{0}', space=sflag, size = 0x4, scoped, tag = 'scoped memory for tile.23']
  %s0 = inlined_call_operand.vmem [shape: f32[32], index: 0, kind: input, shape index: {}]
  %s1 = inlined_call_operand.vmem [shape: f32[4,32], index: 1, kind: output, shape index: {}]
  // Predicated region
  $region2: #{tile.23} parent=0 // pred_check
    _
  $region3: #{tile.23} parent=0 // pred_check_branch
    %3 = sbr.rel (0) target = $region5
  $region4: #{tile.23} parent=0 // pred_region
    _
  $region5: #{tile.23} parent=0 // pred_fallthru
    _
  %v4 = vld [vmem:[%s0] ss:$0 sm:$0xff]
  %5 = vst [vmem:[%s1] sm:$0xf] %v4

// kernel: tile.19
$region0: #{tile.19}
  %s0 = inlined_call_operand.vmem [shape: f32[16,8], index: 0, kind: input, shape index: {}]
  %s1 = inlined_call_operand.vmem [shape: f32[1,128], index: 1, kind: output, shape index: {}]
  $region1: #{tile.19} parent=0
    #allocation0 [shape = 'u8[4096]{0}', space=vmem, size = 0x1000, scoped, tag = 'scoped mem for output reshape']
    %v2 = vld [vmem:[%s0] sm:$0x1]
    %vm3 = vcmask 64512
    %4 = vst.msk [vmem:[#allocation0] sm:$0x1] %vm3, %v2
    %s5 = scalar_lea.vmem %s0, 15
    %v6 = vld [vmem:[%s5] sm:$0x1]
    %7 = vrot.lane.b32.xlu0 %v6, 120
    %v8 = vpop.permute.xlu0 %7
    %vm9 = vcmask 1048512
    %10 = vst.msk [vmem:[#allocation0] sm:$0x1] %vm9, %v8
    %s11 = scalar_lea.vmem %s0, 14
    %v12 = vld [vmem:[%s11] sm:$0x1]
    %13 = vrot.lane.b32.xlu0 %v12, 112
    %v14 = vpop.permute.xlu0 %13
    %vm15 = vcmask 982912
    %16 = vst.msk [vmem:[#allocation0] sm:$0x1] %vm15, %v14
    %s17 = scalar_lea.vmem %s0, 13
    %v18 = vld [vmem:[%s17] sm:$0x1]
    %19 = vrot.lane.b32.xlu0 %v18, 104
    %v20 = vpop.permute.xlu0 %19
    %vm21 = vcmask 917312
    %22 = vst.msk [vmem:[#allocation0] sm:$0x1] %vm21, %v20
    %s23 = scalar_lea.vmem %s0, 12
    %v24 = vld [vmem:[%s23] sm:$0x1]
    %25 = vrot.lane.b32.xlu0 %v24, 96
    %v26 = vpop.permute.xlu0 %25
    %vm27 = vcmask 851712
    %28 = vst.msk [vmem:[#allocation0] sm:$0x1] %vm27, %v26
    %s29 = scalar_lea.vmem %s0, 11
    %v30 = vld [vmem:[%s29] sm:$0x1]
    %31 = vrot.lane.b32.xlu0 %v30, 88
    %v32 = vpop.permute.xlu0 %31
    %vm33 = vcmask 786112
    %34 = vst.msk [vmem:[#allocation0] sm:$0x1] %vm33, %v32
    %s35 = scalar_lea.vmem %s0, 10
    %v36 = vld [vmem:[%s35] sm:$0x1]
    %37 = vrot.lane.b32.xlu0 %v36, 80
    %v38 = vpop.permute.xlu0 %37
    %vm39 = vcmask 720512
    %40 = vst.msk [vmem:[#allocation0] sm:$0x1] %vm39, %v38
    %s41 = scalar_lea.vmem %s0, 9
    %v42 = vld [vmem:[%s41] sm:$0x1]
    %43 = vrot.lane.b32.xlu0 %v42, 72
    %v44 = vpop.permute.xlu0 %43
    %vm45 = vcmask 654912
    %46 = vst.msk [vmem:[#allocation0] sm:$0x1] %vm45, %v44
    %s47 = scalar_lea.vmem %s0, 8
    %v48 = vld [vmem:[%s47] sm:$0x1]
    %49 = vrot.lane.b32.xlu0 %v48, 64
    %v50 = vpop.permute.xlu0 %49
    %vm51 = vcmask 589312
    %52 = vst.msk [vmem:[#allocation0] sm:$0x1] %vm51, %v50
    %s53 = scalar_lea.vmem %s0, 7
    %v54 = vld [vmem:[%s53] sm:$0x1]
    %55 = vrot.lane.b32.xlu0 %v54, 56
    %v56 = vpop.permute.xlu0 %55
    %vm57 = vcmask 523712
    %58 = vst.msk [vmem:[#allocation0] sm:$0x1] %vm57, %v56
    %s59 = scalar_lea.vmem %s0, 6
    %v60 = vld [vmem:[%s59] sm:$0x1]
    %61 = vrot.lane.b32.xlu0 %v60, 48
    %v62 = vpop.permute.xlu0 %61
    %vm63 = vcmask 458112
    %64 = vst.msk [vmem:[#allocation0] sm:$0x1] %vm63, %v62
    %s65 = scalar_lea.vmem %s0, 5
    %v66 = vld [vmem:[%s65] sm:$0x1]
    %67 = vrot.lane.b32.xlu0 %v66, 40
    %v68 = vpop.permute.xlu0 %67
    %vm69 = vcmask 392512
    %70 = vst.msk [vmem:[#allocation0] sm:$0x1] %vm69, %v68
    %s71 = scalar_lea.vmem %s0, 4
    %v72 = vld [vmem:[%s71] sm:$0x1]
    %73 = vrot.lane.b32.xlu0 %v72, 32
    %v74 = vpop.permute.xlu0 %73
    %vm75 = vcmask 326912
    %76 = vst.msk [vmem:[#allocation0] sm:$0x1] %vm75, %v74
    %s77 = scalar_lea.vmem %s0, 3
    %v78 = vld [vmem:[%s77] sm:$0x1]
    %79 = vrot.lane.b32.xlu0 %v78, 24
    %v80 = vpop.permute.xlu0 %79
    %vm81 = vcmask 261312
    %82 = vst.msk [vmem:[#allocation0] sm:$0x1] %vm81, %v80
    %s83 = scalar_lea.vmem %s0, 2
    %v84 = vld [vmem:[%s83] sm:$0x1]
    %85 = vrot.lane.b32.xlu0 %v84, 16
    %v86 = vpop.permute.xlu0 %85
    %vm87 = vcmask 195712
    %88 = vst.msk [vmem:[#allocation0] sm:$0x1] %vm87, %v86
    %s89 = scalar_lea.vmem %s0, 1
    %v90 = vld [vmem:[%s89] sm:$0x1]
    %91 = vrot.lane.b32.xlu0 %v90, 8
    %v92 = vpop.permute.xlu0 %91
    %vm93 = vcmask 130112
    %94 = vst.msk [vmem:[#allocation0] sm:$0x1] %vm93, %v92
    %s96 = sshllo.u32 0, 1
    %v98 = vld [vmem:[#allocation0] sm:%s96]
    %s99 = sshllo.u32 0, 1
    %100 = vst [vmem:[%s1] sm:%s99] %v98

// kernel: tile.24
$region0: #{tile.24}
  %s0 = inlined_call_operand.vmem [shape: f32[4,32], index: 0, kind: input, shape index: {}]
  %s1 = inlined_call_operand.vmem [shape: f32[1,128], index: 1, kind: output, shape index: {}]
  $region1: #{tile.24} parent=0
    #allocation0 [shape = 'u8[4096]{0}', space=vmem, size = 0x1000, scoped, tag = 'scoped mem for output reshape']
    #allocation1 [shape = 'u8[4096]{0}', space=vmem, size = 0x1000, scoped, tag = 'scoped mem for input reshape']
    %s3 = sshllo.u32 0, 4
    %v4 = vld [vmem:[%s0] sm:%s3]
    %5 = vst [vmem:[#allocation1] sm:%s3] %v4
    %v6 = vld [vmem:[#allocation1] sm:$0x1]
    %vm7 = vcmask 261120
    %8 = vst.msk [vmem:[#allocation0] sm:$0x1] %vm7, %v6
    %s9 = scalar_lea.vmem [#allocation1], 3
    %v10 = vld [vmem:[%s9] sm:$0x1]
    %11 = vrot.lane.b32.xlu0 %v10, 96
    %v12 = vpop.permute.xlu0 %11
    %vm13 = vcmask 1048320
    %14 = vst.msk [vmem:[#allocation0] sm:$0x1] %vm13, %v12
    %s15 = scalar_lea.vmem [#allocation1], 2
    %v16 = vld [vmem:[%s15] sm:$0x1]
    %17 = vrot.lane.b32.xlu0 %v16, 64
    %v18 = vpop.permute.xlu0 %17
    %vm19 = vcmask 785920
    %20 = vst.msk [vmem:[#allocation0] sm:$0x1] %vm19, %v18
    %s21 = scalar_lea.vmem [#allocation1], 1
    %v22 = vld [vmem:[%s21] sm:$0x1]
    %23 = vrot.lane.b32.xlu0 %v22, 32
    %v24 = vpop.permute.xlu0 %23
    %vm25 = vcmask 523520
    %26 = vst.msk [vmem:[#allocation0] sm:$0x1] %vm25, %v24
    %s28 = sshllo.u32 0, 1
    %v30 = vld [vmem:[#allocation0] sm:%s28]
    %s31 = sshllo.u32 0, 1
    %32 = vst [vmem:[%s1] sm:%s31] %v30

// kernel: tile.28
$region0: #{tile.28}
  #allocation0 [shape = 's32[1]{0}', space=sflag, size = 0x4, scoped, tag = 'scoped memory for tile.28']
  %s0 = inlined_call_operand.vmem [shape: f32[64], index: 0, kind: input, shape index: {}]
  %s1 = inlined_call_operand.vmem [shape: f32[2,64], index: 1, kind: output, shape index: {}]
  // Predicated region
  $region2: #{tile.28} parent=0 // pred_check
    _
  $region3: #{tile.28} parent=0 // pred_check_branch
    %3 = sbr.rel (0) target = $region5
  $region4: #{tile.28} parent=0 // pred_region
    _
  $region5: #{tile.28} parent=0 // pred_fallthru
    _
  %v4 = vld [vmem:[%s0] ss:$0 sm:$0xff]
  %5 = vst [vmem:[%s1] sm:$0x3] %v4

// kernel: tile.29
$region0: #{tile.29}
  %s0 = inlined_call_operand.vmem [shape: f32[2,64], index: 0, kind: input, shape index: {}]
  %s1 = inlined_call_operand.vmem [shape: f32[1,128], index: 1, kind: output, shape index: {}]
  $region1: #{tile.29} parent=0
    #allocation0 [shape = 'u8[4096]{0}', space=vmem, size = 0x1000, scoped, tag = 'scoped mem for output reshape']
    #allocation1 [shape = 'u8[4096]{0}', space=vmem, size = 0x1000, scoped, tag = 'scoped mem for input reshape']
    %s3 = sshllo.u32 0, 2
    %v4 = vld [vmem:[%s0] sm:%s3]
    %5 = vst [vmem:[#allocation1] sm:%s3] %v4
    %v6 = vld [vmem:[#allocation1] sm:$0x1]
    %vm7 = vcmask 523264
    %8 = vst.msk [vmem:[#allocation0] sm:$0x1] %vm7, %v6
    %s9 = scalar_lea.vmem [#allocation1], 1
    %v10 = vld [vmem:[%s9] sm:$0x1]
    %11 = vrot.lane.b32.xlu0 %v10, 64
    %v12 = vpop.permute.xlu0 %11
    %vm13 = vcmask 1048064
    %14 = vst.msk [vmem:[#allocation0] sm:$0x1] %vm13, %v12
    %s16 = sshllo.u32 0, 1
    %v18 = vld [vmem:[#allocation0] sm:%s16]
    %s19 = sshllo.u32 0, 1
    %20 = vst [vmem:[%s1] sm:%s19] %v18

// kernel: net_forward.1
$region0: #{net_forward.1}
  #allocation0 [shape = 'u32[]', space=smem, size = 0x4, offset = 0x4, fixed_abs, tag = 'smem constant byte address 0x4 - core index']
  #allocation1 [shape = 'u32[144,128]{1,0:T(1,128)}', space=vmem, size = 0x12000, scoped, tag = 'internal scratch']
  #allocation2 [shape = 'f32[1,1]{1,0:T(1,128)S(1)}', space=vmem, size = 0x200, scoped, tag = 'scoped memory for net_forward.1']
  %s0 = inlined_call_operand.vmem [shape: bf16[176,272], index: 0, kind: input, shape index: {}]
  %s1 = inlined_call_operand.vmem [shape: bf16[272,128], index: 1, kind: input, shape index: {}]
  %s2 = inlined_call_operand.vmem [shape: f32[1,128], index: 2, kind: input, shape index: {}]
  %s3 = inlined_call_operand.vmem [shape: bf16[128,16], index: 3, kind: input, shape index: {}]
  %s4 = inlined_call_operand.vmem [shape: f32[1,16], index: 4, kind: input, shape index: {}]
  %s5 = inlined_call_operand.vmem [shape: bf16[320,128], index: 5, kind: input, shape index: {}]
  %s6 = inlined_call_operand.vmem [shape: f32[1,128], index: 6, kind: input, shape index: {}]
  %s7 = inlined_call_operand.vmem [shape: bf16[256,128], index: 7, kind: input, shape index: {}]
  %s8 = inlined_call_operand.vmem [shape: f32[1,128], index: 8, kind: input, shape index: {}]
  %s9 = inlined_call_operand.vmem [shape: bf16[256,128], index: 9, kind: input, shape index: {}]
  %s10 = inlined_call_operand.vmem [shape: f32[1,128], index: 10, kind: input, shape index: {}]
  %s11 = inlined_call_operand.vmem [shape: f32[128,3], index: 11, kind: input, shape index: {}]
  %s12 = inlined_call_operand.vmem [shape: f32[1,3], index: 12, kind: input, shape index: {}]
  %s13 = inlined_call_operand.vmem [shape: f32[1,3], index: 13, kind: input, shape index: {}]
  %s14 = inlined_call_operand.vmem [shape: f32[1,3], index: 14, kind: input, shape index: {}]
  %s15 = inlined_call_operand.<no memory space> [shape: f32[1,1], index: 15, kind: input, shape index: {}]
  %s16 = inlined_call_operand.vmem [shape: f32[8,256], index: 16, kind: output, shape index: {}]
  %s17 = sld [smem:[#allocation0]]
  $region74: #{net_forward.1} parent=0
    _
  %s19 = ssub.s32 1, %s17
  %s20 = scalar_select 0, %s19, %s17
  %v21 = vstv %s15
  %22 = vst [vmem:[#allocation2] sm:$0x1] %v21
  // Predicated region
  $region2: #{net_forward.1} parent=0 // pred_check
    _
  $region3: #{net_forward.1} parent=0 // pred_check_branch
    %24 = sbr.rel (0) target = $region5
  $region4: #{net_forward.1} parent=0 // pred_region
    _
  $region5: #{net_forward.1} parent=0 // pred_fallthru
    _
  // Predicated region
  $region6: #{net_forward.1} parent=0 // pred_check
    _
  $region7: #{net_forward.1} parent=0 // pred_check_branch
    %26 = sbr.rel (0) target = $region9
  $region8: #{net_forward.1} parent=0 // pred_region
    _
  $region9: #{net_forward.1} parent=0 // pred_fallthru
    _
  // Predicated region
  $region10: #{net_forward.1} parent=0 // pred_check
    _
  $region11: #{net_forward.1} parent=0 // pred_check_branch
    %28 = sbr.rel (0) target = $region13
  $region12: #{net_forward.1} parent=0 // pred_region
    _
  $region13: #{net_forward.1} parent=0 // pred_fallthru
    _
  // Predicated region
  $region14: #{net_forward.1} parent=0 // pred_check
    _
  $region15: #{net_forward.1} parent=0 // pred_check_branch
    %30 = sbr.rel (0) target = $region17
  $region16: #{net_forward.1} parent=0 // pred_region
    _
  $region17: #{net_forward.1} parent=0 // pred_fallthru
    _
  // Predicated region
  $region18: #{net_forward.1} parent=0 // pred_check
    _
  $region19: #{net_forward.1} parent=0 // pred_check_branch
    %32 = sbr.rel (0) target = $region21
  $region20: #{net_forward.1} parent=0 // pred_region
    _
  $region21: #{net_forward.1} parent=0 // pred_fallthru
    _
  // Predicated region
  $region22: #{net_forward.1} parent=0 // pred_check
    _
  $region23: #{net_forward.1} parent=0 // pred_check_branch
    %34 = sbr.rel (0) target = $region25
  $region24: #{net_forward.1} parent=0 // pred_region
    _
  $region25: #{net_forward.1} parent=0 // pred_fallthru
    _
  // Predicated region
  $region26: #{net_forward.1} parent=0 // pred_check
    _
  $region27: #{net_forward.1} parent=0 // pred_check_branch
    %36 = sbr.rel (0) target = $region29
  $region28: #{net_forward.1} parent=0 // pred_region
    _
  $region29: #{net_forward.1} parent=0 // pred_fallthru
    _
  // Predicated region
  $region30: #{net_forward.1} parent=0 // pred_check
    _
  $region31: #{net_forward.1} parent=0 // pred_check_branch
    %38 = sbr.rel (0) target = $region33
  $region32: #{net_forward.1} parent=0 // pred_region
    _
  $region33: #{net_forward.1} parent=0 // pred_fallthru
    _
  // Predicated region
  $region34: #{net_forward.1} parent=0 // pred_check
    _
  $region35: #{net_forward.1} parent=0 // pred_check_branch
    %40 = sbr.rel (0) target = $region37
  $region36: #{net_forward.1} parent=0 // pred_region
    _
  $region37: #{net_forward.1} parent=0 // pred_fallthru
    _
  // Predicated region
  $region38: #{net_forward.1} parent=0 // pred_check
    _
  $region39: #{net_forward.1} parent=0 // pred_check_branch
    %42 = sbr.rel (0) target = $region41
  $region40: #{net_forward.1} parent=0 // pred_region
    _
  $region41: #{net_forward.1} parent=0 // pred_fallthru
    _
  // Predicated region
  $region42: #{net_forward.1} parent=0 // pred_check
    _
  $region43: #{net_forward.1} parent=0 // pred_check_branch
    %44 = sbr.rel (0) target = $region45
  $region44: #{net_forward.1} parent=0 // pred_region
    _
  $region45: #{net_forward.1} parent=0 // pred_fallthru
    _
  // Predicated region
  $region46: #{net_forward.1} parent=0 // pred_check
    _
  $region47: #{net_forward.1} parent=0 // pred_check_branch
    %46 = sbr.rel (0) target = $region49
  $region48: #{net_forward.1} parent=0 // pred_region
    _
  $region49: #{net_forward.1} parent=0 // pred_fallthru
    _
  // Predicated region
  $region50: #{net_forward.1} parent=0 // pred_check
    _
  $region51: #{net_forward.1} parent=0 // pred_check_branch
    %48 = sbr.rel (0) target = $region53
  $region52: #{net_forward.1} parent=0 // pred_region
    _
  $region53: #{net_forward.1} parent=0 // pred_fallthru
    _
  // Predicated region
  $region54: #{net_forward.1} parent=0 // pred_check
    _
  $region55: #{net_forward.1} parent=0 // pred_check_branch
    %50 = sbr.rel (0) target = $region57
  $region56: #{net_forward.1} parent=0 // pred_region
    _
  $region57: #{net_forward.1} parent=0 // pred_fallthru
    _
  // Predicated region
  $region58: #{net_forward.1} parent=0 // pred_check
    _
  $region59: #{net_forward.1} parent=0 // pred_check_branch
    %52 = sbr.rel (0) target = $region61
  $region60: #{net_forward.1} parent=0 // pred_region
    _
  $region61: #{net_forward.1} parent=0 // pred_fallthru
    _
  // Predicated region
  $region62: #{net_forward.1} parent=0 // pred_check
    _
  $region63: #{net_forward.1} parent=0 // pred_check_branch
    %54 = sbr.rel (0) target = $region65
  $region64: #{net_forward.1} parent=0 // pred_region
    _
  $region65: #{net_forward.1} parent=0 // pred_fallthru
    _
  %v56 = vld [vmem:[%s0] sm:$0xff]
  %v57 = vld [vmem:[%s0 + $0x8] sm:$0xf]
  %v58 = vld [vmem:[%s0 + $0xc] sm:$0xff]
  %v59 = vld [vmem:[%s0 + $0x14] sm:$0xf]
  %v60 = vld [vmem:[%s0 + $0x18] sm:$0xff]
  %v61 = vld [vmem:[%s0 + $0x20] sm:$0xf]
  %v62 = vld [vmem:[%s0 + $0x24] sm:$0xff]
  %v63 = vld [vmem:[%s0 + $0x2c] sm:$0xf]
  %v64 = vld [vmem:[%s0 + $0x30] sm:$0xff]
  %v65 = vld [vmem:[%s0 + $0x38] sm:$0xf]
  %v66 = vld [vmem:[%s0 + $0x3c] sm:$0xff]
  %v67 = vld [vmem:[%s0 + $0x44] sm:$0xf]
  %v68 = vld [vmem:[%s0 + $0x48] sm:$0xff]
  %v69 = vld [vmem:[%s0 + $0x50] sm:$0xf]
  %v70 = vld [vmem:[%s0 + $0x54] sm:$0xff]
  %v71 = vld [vmem:[%s0 + $0x5c] sm:$0xf]
  %v72 = vld [vmem:[%s0 + $0x60] sm:$0xff]
  %v73 = vld [vmem:[%s0 + $0x68] sm:$0xf]
  %v74 = vld [vmem:[%s0 + $0x6c] sm:$0xff]
  %v75 = vld [vmem:[%s0 + $0x74] sm:$0xf]
  %v76 = vld [vmem:[%s0 + $0x78] sm:$0xff]
  %v77 = vld [vmem:[%s0 + $0x80] sm:$0xf]
  %v78 = vld [vmem:[%s0 + $0x84] sm:$0xff]
  %v79 = vld [vmem:[%s0 + $0x8c] sm:$0xf]
  %v80 = vld [vmem:[%s0 + $0x90] sm:$0xff]
  %v81 = vld [vmem:[%s0 + $0x98] sm:$0xf]
  %v82 = vld [vmem:[%s0 + $0x9c] sm:$0xff]
  %v83 = vld [vmem:[%s0 + $0xa4] sm:$0xf]
  %v84 = vld [vmem:[%s0 + $0xa8] sm:$0xff]
  %v85 = vld [vmem:[%s0 + $0xb0] sm:$0xf]
  %v86 = vld [vmem:[%s0 + $0xb4] sm:$0xff]
  %v87 = vld [vmem:[%s0 + $0xbc] sm:$0xf]
  %v88 = vld [vmem:[%s0 + $0xc0] sm:$0xff]
  %v89 = vld [vmem:[%s0 + $0xc8] sm:$0xf]
  %v90 = vld [vmem:[%s0 + $0xcc] sm:$0xff]
  %v91 = vld [vmem:[%s0 + $0xd4] sm:$0xf]
  %v92 = vld [vmem:[%s0 + $0xd8] sm:$0xff]
  %v93 = vld [vmem:[%s0 + $0xe0] sm:$0xf]
  %v94 = vld [vmem:[%s0 + $0xe4] sm:$0xff]
  %v95 = vld [vmem:[%s0 + $0xec] sm:$0xf]
  %v96 = vld [vmem:[%s0 + $0xf0] sm:$0xff]
  %v97 = vld [vmem:[%s0 + $0xf8] sm:$0xf]
  %v98 = vld [vmem:[%s0 + $0xfc] sm:$0xff]
  %v99 = vld [vmem:[%s0 + $0x104] sm:$0xf]
  %v100 = vld [vmem:[%s1] sm:$0xf]
  %v101 = vld [vmem:[%s1 + $0x4] sm:$0xf]
  %v102 = vld [vmem:[%s1 + $0x8] sm:$0xf]
  %v103 = vld [vmem:[%s1 + $0xc] sm:$0xf]
  %v104 = vld [vmem:[%s1 + $0x10] sm:$0xf]
  %v105 = vld [vmem:[%s1 + $0x14] sm:$0xf]
  %v106 = vld [vmem:[%s1 + $0x18] sm:$0xf]
  %v107 = vld [vmem:[%s1 + $0x1c] sm:$0xf]
  %v108 = vld [vmem:[%s1 + $0x20] sm:$0xf]
  %v109 = vld [vmem:[%s1 + $0x24] sm:$0xf]
  %v110 = vld [vmem:[%s1 + $0x28] sm:$0xf]
  %v111 = vld [vmem:[%s1 + $0x2c] sm:$0xf]
  %v112 = vld [vmem:[%s1 + $0x30] sm:$0xf]
  %v113 = vld [vmem:[%s1 + $0x34] sm:$0xf]
  %v114 = vld [vmem:[%s1 + $0x38] sm:$0xf]
  %v115 = vld [vmem:[%s1 + $0x3c] sm:$0xf]
  %v116 = vld [vmem:[%s1 + $0x40] sm:$0xf]
  %v117 = vld [vmem:[%s1 + $0x44] sm:$0xf]
  %v118 = vld [vmem:[%s1 + $0x48] sm:$0xf]
  %v119 = vld [vmem:[%s1 + $0x4c] sm:$0xf]
  %v120 = vld [vmem:[%s1 + $0x50] sm:$0xf]
  %v121 = vld [vmem:[%s1 + $0x54] sm:$0xf]
  %v122 = vld [vmem:[%s1 + $0x58] sm:$0xf]
  %v123 = vld [vmem:[%s1 + $0x5c] sm:$0xf]
  %v124 = vld [vmem:[%s1 + $0x60] sm:$0xf]
  %v125 = vld [vmem:[%s1 + $0x64] sm:$0xf]
  %v126 = vld [vmem:[%s1 + $0x68] sm:$0xf]
  %v127 = vld [vmem:[%s1 + $0x6c] sm:$0xf]
  %v128 = vld [vmem:[%s1 + $0x70] sm:$0xf]
  %v129 = vld [vmem:[%s1 + $0x74] sm:$0xf]
  %v130 = vld [vmem:[%s1 + $0x78] sm:$0xf]
  %v131 = vld [vmem:[%s1 + $0x7c] sm:$0xf]
  %v132 = vld [vmem:[%s1 + $0x80] sm:$0xf]
  %v133 = vld [vmem:[%s1 + $0x84] sm:$0xf]
  %v134 = vld [vmem:[%s2] sm:$0x1]
  %v136 = vlaneseq
  %v137 = vshrl.u32 %v136, 7
  %v138 = vsub.s32 0, %v137
  %v139 = vrot.slane %v134, %v138
  %v185 = vunpack.c.l.b16 %v56
  %v186 = vunpack.c.h.b16 %v56
  %v187 = vunpack.c.l.b16 %v57
  %v188 = vunpack.c.l.b16 %v58
  %v189 = vunpack.c.h.b16 %v58
  %v190 = vunpack.c.l.b16 %v59
  %v191 = vunpack.c.l.b16 %v60
  %v192 = vunpack.c.h.b16 %v60
  %v193 = vunpack.c.l.b16 %v61
  %v194 = vunpack.c.l.b16 %v62
  %v195 = vunpack.c.h.b16 %v62
  %v196 = vunpack.c.l.b16 %v63
  %v197 = vunpack.c.l.b16 %v64
  %v198 = vunpack.c.h.b16 %v64
  %v199 = vunpack.c.l.b16 %v65
  %v200 = vunpack.c.l.b16 %v66
  %v201 = vunpack.c.h.b16 %v66
  %v202 = vunpack.c.l.b16 %v67
  %v203 = vunpack.c.l.b16 %v68
  %v204 = vunpack.c.h.b16 %v68
  %v205 = vunpack.c.l.b16 %v69
  %v206 = vunpack.c.l.b16 %v70
  %v207 = vunpack.c.h.b16 %v70
  %v208 = vunpack.c.l.b16 %v71
  %v209 = vunpack.c.l.b16 %v72
  %v210 = vunpack.c.h.b16 %v72
  %v211 = vunpack.c.l.b16 %v73
  %v212 = vunpack.c.l.b16 %v74
  %v213 = vunpack.c.h.b16 %v74
  %v214 = vunpack.c.l.b16 %v75
  %v215 = vunpack.c.l.b16 %v76
  %v216 = vunpack.c.h.b16 %v76
  %v217 = vunpack.c.l.b16 %v77
  %v218 = vunpack.c.l.b16 %v78
  %v219 = vunpack.c.h.b16 %v78
  %v220 = vunpack.c.l.b16 %v79
  %v221 = vunpack.c.l.b16 %v80
  %v222 = vunpack.c.h.b16 %v80
  %v223 = vunpack.c.l.b16 %v81
  %v224 = vunpack.c.l.b16 %v82
  %v225 = vunpack.c.h.b16 %v82
  %v226 = vunpack.c.l.b16 %v83
  %v227 = vunpack.c.l.b16 %v84
  %v228 = vunpack.c.h.b16 %v84
  %v229 = vunpack.c.l.b16 %v85
  %v230 = vunpack.c.l.b16 %v86
  %v231 = vunpack.c.h.b16 %v86
  %v232 = vunpack.c.l.b16 %v87
  %v233 = vunpack.c.l.b16 %v88
  %v234 = vunpack.c.h.b16 %v88
  %v235 = vunpack.c.l.b16 %v89
  %v236 = vunpack.c.l.b16 %v90
  %v237 = vunpack.c.h.b16 %v90
  %v238 = vunpack.c.l.b16 %v91
  %v239 = vunpack.c.l.b16 %v92
  %v240 = vunpack.c.h.b16 %v92
  %v241 = vunpack.c.l.b16 %v93
  %v242 = vunpack.c.l.b16 %v94
  %v243 = vunpack.c.h.b16 %v94
  %v244 = vunpack.c.l.b16 %v95
  %v245 = vunpack.c.l.b16 %v96
  %v246 = vunpack.c.h.b16 %v96
  %v247 = vunpack.c.l.b16 %v97
  %v248 = vunpack.c.l.b16 %v98
  %v249 = vunpack.c.h.b16 %v98
  %v250 = vunpack.c.l.b16 %v99
  %v251 = vpack.c.b16 %v188, %v185
  %v252 = vpack.c.b16 %v189, %v186
  %v253 = vpack.c.b16 %v190, %v187
  %v254 = vpack.c.b16 %v194, %v191
  %v255 = vpack.c.b16 %v195, %v192
  %v256 = vpack.c.b16 %v196, %v193
  %v257 = vpack.c.b16 %v200, %v197
  %v258 = vpack.c.b16 %v201, %v198
  %v259 = vpack.c.b16 %v202, %v199
  %v260 = vpack.c.b16 %v206, %v203
  %v261 = vpack.c.b16 %v207, %v204
  %v262 = vpack.c.b16 %v208, %v205
  %v263 = vpack.c.b16 %v212, %v209
  %v264 = vpack.c.b16 %v213, %v210
  %v265 = vpack.c.b16 %v214, %v211
  %v266 = vpack.c.b16 %v218, %v215
  %v267 = vpack.c.b16 %v219, %v216
  %v268 = vpack.c.b16 %v220, %v217
  %v269 = vpack.c.b16 %v224, %v221
  %v270 = vpack.c.b16 %v225, %v222
  %v271 = vpack.c.b16 %v226, %v223
  %v272 = vpack.c.b16 %v230, %v227
  %v273 = vpack.c.b16 %v231, %v228
  %v274 = vpack.c.b16 %v232, %v229
  %v275 = vpack.c.b16 %v236, %v233
  %v276 = vpack.c.b16 %v237, %v234
  %v277 = vpack.c.b16 %v238, %v235
  %v278 = vpack.c.b16 %v242, %v239
  %v279 = vpack.c.b16 %v243, %v240
  %v280 = vpack.c.b16 %v244, %v241
  %v281 = vpack.c.b16 %v248, %v245
  %v282 = vpack.c.b16 %v249, %v246
  %v283 = vpack.c.b16 %v250, %v247
  %v340 = vunpack.c.l.b16 %v100
  %v341 = vunpack.c.l.b16 %v101
  %v342 = vunpack.c.l.b16 %v102
  %v343 = vunpack.c.l.b16 %v103
  %v344 = vunpack.c.l.b16 %v104
  %v345 = vunpack.c.l.b16 %v105
  %v346 = vunpack.c.l.b16 %v106
  %v347 = vunpack.c.l.b16 %v107
  %v348 = vunpack.c.l.b16 %v108
  %v349 = vunpack.c.l.b16 %v109
  %v350 = vunpack.c.l.b16 %v110
  %v351 = vunpack.c.l.b16 %v111
  %v352 = vunpack.c.l.b16 %v112
  %v353 = vunpack.c.l.b16 %v113
  %v354 = vunpack.c.l.b16 %v114
  %v355 = vunpack.c.l.b16 %v115
  %v356 = vunpack.c.l.b16 %v116
  %v357 = vunpack.c.l.b16 %v117
  %v358 = vunpack.c.l.b16 %v118
  %v359 = vunpack.c.l.b16 %v119
  %v360 = vunpack.c.l.b16 %v120
  %v361 = vunpack.c.l.b16 %v121
  %v362 = vunpack.c.l.b16 %v122
  %v363 = vunpack.c.l.b16 %v123
  %v364 = vunpack.c.l.b16 %v124
  %v365 = vunpack.c.l.b16 %v125
  %v366 = vunpack.c.l.b16 %v126
  %v367 = vunpack.c.l.b16 %v127
  %v368 = vunpack.c.l.b16 %v128
  %v369 = vunpack.c.l.b16 %v129
  %v370 = vunpack.c.l.b16 %v130
  %v371 = vunpack.c.l.b16 %v131
  %v372 = vunpack.c.l.b16 %v132
  %v373 = vunpack.c.l.b16 %v133
  %v374 = vpack.c.b16 %v341, %v340
  %v375 = vpack.c.b16 %v343, %v342
  %v376 = vpack.c.b16 %v345, %v344
  %v377 = vpack.c.b16 %v347, %v346
  %v378 = vpack.c.b16 %v349, %v348
  %v379 = vpack.c.b16 %v351, %v350
  %v380 = vpack.c.b16 %v353, %v352
  %v381 = vpack.c.b16 %v355, %v354
  %v382 = vpack.c.b16 %v357, %v356
  %v383 = vpack.c.b16 %v359, %v358
  %v384 = vpack.c.b16 %v361, %v360
  %v385 = vpack.c.b16 %v363, %v362
  %v386 = vpack.c.b16 %v365, %v364
  %v387 = vpack.c.b16 %v367, %v366
  %v388 = vpack.c.b16 %v369, %v368
  %v389 = vpack.c.b16 %v371, %v370
  %v390 = vpack.c.b16 %v373, %v372
  %vm408 = vcmask 130048
  %v410 = vsel %vm408, %v253, 0
  %v413 = vsel %vm408, %v256, 0
  %v416 = vsel %vm408, %v259, 0
  %v419 = vsel %vm408, %v262, 0
  %v422 = vsel %vm408, %v265, 0
  %v425 = vsel %vm408, %v268, 0
  %v428 = vsel %vm408, %v271, 0
  %v431 = vsel %vm408, %v274, 0
  %v434 = vsel %vm408, %v277, 0
  %v437 = vsel %vm408, %v280, 0
  %v440 = vsel %vm408, %v283, 0
  %442 = vmatprep.subr.bf16.mxu0 0
  %443 = vmatpush1.bf16.msra.mxu0 %v374
  %444 = vmatprep.subr.bf16.mxu0 0
  %445 = vmatpush1.bf16.msra.mxu0 %v375
  %446 = vmatprep.subr.bf16.mxu0 0
  %447 = vmatpush1.bf16.msra.mxu0 %v376
  %448 = vmatprep.subr.bf16.mxu0 0
  %449 = vmatpush1.bf16.msra.mxu0 %v377
  %450 = vmatprep.subr.bf16.mxu0 0
  %451 = vmatpush1.bf16.msra.mxu0 %v378
  %452 = vmatprep.subr.bf16.mxu0 0
  %453 = vmatpush1.bf16.msra.mxu0 %v379
  %454 = vmatprep.subr.bf16.mxu0 0
  %455 = vmatpush1.bf16.msra.mxu0 %v380
  %456 = vmatprep.subr.bf16.mxu0 0
  %457 = vmatpush1.bf16.msra.mxu0 %v381
  %458 = vmatprep.subr.bf16.mxu0 0
  %459 = vmatpush1.bf16.msra.mxu0 %v382
  %460 = vmatprep.subr.bf16.mxu0 0
  %461 = vmatpush1.bf16.msra.mxu0 %v383
  %462 = vmatprep.subr.bf16.mxu0 0
  %463 = vmatpush1.bf16.msra.mxu0 %v384
  %464 = vmatprep.subr.bf16.mxu0 0
  %465 = vmatpush1.bf16.msra.mxu0 %v385
  %466 = vmatprep.subr.bf16.mxu0 0
  %467 = vmatpush1.bf16.msra.mxu0 %v386
  %468 = vmatprep.subr.bf16.mxu0 0
  %469 = vmatpush1.bf16.msra.mxu0 %v387
  %470 = vmatprep.subr.bf16.mxu0 0
  %471 = vmatpush1.bf16.msra.mxu0 %v388
  %472 = vmatprep.subr.bf16.mxu0 0
  %473 = vmatpush1.bf16.msra.mxu0 %v389
  %474 = vmatprep.mubr.bf16.mxu0 %v252
  %475 = vmatmul.mubr.bf16.gmra.mrb[0].mxu0 %v251
  %v476 = vpop.f32.mrb[0].mxu0
  %v477 = vadd.f32 %v139, %v476
  %v478 = vpop.f32.mrb[0].mxu0
  %v479 = vpop.f32.mrb[0].mxu0
  %v480 = vadd.f32 %v139, %v479
  %v481 = vpop.f32.mrb[0].mxu0
  %482 = vmatprep.mubr.bf16.mxu0 %v255
  %483 = vmatmul.mubr.bf16.gmra.mrb[0].mxu0 %v254
  %v484 = vpop.f32.mrb[0].mxu0
  %v485 = vadd.f32 %v139, %v484
  %v486 = vpop.f32.mrb[0].mxu0
  %v487 = vpop.f32.mrb[0].mxu0
  %v488 = vadd.f32 %v139, %v487
  %v489 = vpop.f32.mrb[0].mxu0
  %490 = vmatprep.mubr.bf16.mxu0 %v258
  %491 = vmatmul.mubr.bf16.gmra.mrb[0].mxu0 %v257
  %v492 = vpop.f32.mrb[0].mxu0
  %v493 = vadd.f32 %v139, %v492
  %v494 = vpop.f32.mrb[0].mxu0
  %v495 = vpop.f32.mrb[0].mxu0
  %v496 = vadd.f32 %v139, %v495
  %v497 = vpop.f32.mrb[0].mxu0
  %498 = vmatprep.mubr.bf16.mxu0 %v261
  %499 = vmatmul.mubr.bf16.gmra.mrb[0].mxu0 %v260
  %v500 = vpop.f32.mrb[0].mxu0
  %v501 = vadd.f32 %v139, %v500
  %v502 = vpop.f32.mrb[0].mxu0
  %v503 = vpop.f32.mrb[0].mxu0
  %v504 = vadd.f32 %v139, %v503
  %v505 = vpop.f32.mrb[0].mxu0
  %506 = vmatprep.mubr.bf16.mxu0 %v264
  %507 = vmatmul.mubr.bf16.gmra.mrb[0].mxu0 %v263
  %v508 = vpop.f32.mrb[0].mxu0
  %v509 = vadd.f32 %v139, %v508
  %v510 = vpop.f32.mrb[0].mxu0
  %v511 = vpop.f32.mrb[0].mxu0
  %v512 = vadd.f32 %v139, %v511
  %v513 = vpop.f32.mrb[0].mxu0
  %514 = vmatprep.mubr.bf16.mxu0 %v267
  %515 = vmatmul.mubr.bf16.gmra.mrb[0].mxu0 %v266
  %v516 = vpop.f32.mrb[0].mxu0
  %v517 = vadd.f32 %v139, %v516
  %v518 = vpop.f32.mrb[0].mxu0
  %v519 = vpop.f32.mrb[0].mxu0
  %v520 = vadd.f32 %v139, %v519
  %v521 = vpop.f32.mrb[0].mxu0
  %522 = vmatprep.mubr.bf16.mxu0 %v270
  %523 = vmatmul.mubr.bf16.gmra.mrb[0].mxu0 %v269
  %v524 = vpop.f32.mrb[0].mxu0
  %v525 = vadd.f32 %v139, %v524
  %v526 = vpop.f32.mrb[0].mxu0
  %v527 = vpop.f32.mrb[0].mxu0
  %v528 = vadd.f32 %v139, %v527
  %v529 = vpop.f32.mrb[0].mxu0
  %530 = vmatprep.mubr.bf16.mxu0 %v273
  %531 = vmatmul.mubr.bf16.gmra.mrb[0].mxu0 %v272
  %v532 = vpop.f32.mrb[0].mxu0
  %v533 = vadd.f32 %v139, %v532
  %v534 = vpop.f32.mrb[0].mxu0
  %v535 = vpop.f32.mrb[0].mxu0
  %v536 = vadd.f32 %v139, %v535
  %v537 = vpop.f32.mrb[0].mxu0
  %538 = vmatprep.mubr.bf16.mxu0 %v276
  %539 = vmatmul.mubr.bf16.gmra.mrb[0].mxu0 %v275
  %v540 = vpop.f32.mrb[0].mxu0
  %v541 = vadd.f32 %v139, %v540
  %v542 = vpop.f32.mrb[0].mxu0
  %v543 = vpop.f32.mrb[0].mxu0
  %v544 = vadd.f32 %v139, %v543
  %v545 = vpop.f32.mrb[0].mxu0
  %546 = vmatprep.mubr.bf16.mxu0 %v279
  %547 = vmatmul.mubr.bf16.gmra.mrb[0].mxu0 %v278
  %v548 = vpop.f32.mrb[0].mxu0
  %v549 = vadd.f32 %v139, %v548
  %v550 = vpop.f32.mrb[0].mxu0
  %v551 = vpop.f32.mrb[0].mxu0
  %v552 = vadd.f32 %v139, %v551
  %v553 = vpop.f32.mrb[0].mxu0
  %554 = vmatprep.mubr.bf16.mxu0 %v282
  %555 = vmatmul.mubr.bf16.gmra.mrb[0].mxu0 %v281
  %v556 = vpop.f32.mrb[0].mxu0
  %v557 = vadd.f32 %v139, %v556
  %v558 = vpop.f32.mrb[0].mxu0
  %v559 = vpop.f32.mrb[0].mxu0
  %v560 = vadd.f32 %v139, %v559
  %v561 = vpop.f32.mrb[0].mxu0
  %562 = vdwg.mxu0
  %563 = vmatprep.subr.bf16.mxu0 0
  %564 = vmatpush1.bf16.msra.mxu0 %v390
  %565 = vmatprep.subr.bf16.mxu0 0
  %566 = vmatpush1.bf16.msra.mxu0 0
  %567 = vmatprep.subr.bf16.mxu0 0
  %568 = vmatpush1.bf16.msra.mxu0 0
  %569 = vmatprep.subr.bf16.mxu0 0
  %570 = vmatpush1.bf16.msra.mxu0 0
  %571 = vmatprep.subr.bf16.mxu0 0
  %572 = vmatpush1.bf16.msra.mxu0 0
  %573 = vmatprep.subr.bf16.mxu0 0
  %574 = vmatpush1.bf16.msra.mxu0 0
  %575 = vmatprep.subr.bf16.mxu0 0
  %576 = vmatpush1.bf16.msra.mxu0 0
  %577 = vmatprep.subr.bf16.mxu0 0
  %578 = vmatpush1.bf16.msra.mxu0 0
  %579 = vmatprep.subr.bf16.mxu0 0
  %580 = vmatpush1.bf16.msra.mxu0 0
  %581 = vmatprep.subr.bf16.mxu0 0
  %582 = vmatpush1.bf16.msra.mxu0 0
  %583 = vmatprep.subr.bf16.mxu0 0
  %584 = vmatpush1.bf16.msra.mxu0 0
  %585 = vmatprep.subr.bf16.mxu0 0
  %586 = vmatpush1.bf16.msra.mxu0 0
  %587 = vmatprep.subr.bf16.mxu0 0
  %588 = vmatpush1.bf16.msra.mxu0 0
  %589 = vmatprep.subr.bf16.mxu0 0
  %590 = vmatpush1.bf16.msra.mxu0 0
  %591 = vmatprep.subr.bf16.mxu0 0
  %592 = vmatpush1.bf16.msra.mxu0 0
  %593 = vmatprep.subr.bf16.mxu0 0
  %594 = vmatpush1.bf16.msra.mxu0 0
  %595 = vmatprep.mubr.bf16.mxu0 0
  %596 = vmatmul.mubr.bf16.gmra.mrb[0].mxu0 %v410
  %v597 = vpop.f32.mrb[0].mxu0
  %v598 = vadd.f32 %v477, %v597
  %v599 = vpop.f32.mrb[0].mxu0
  %v600 = vpop.f32.mrb[0].mxu0
  %v601 = vadd.f32 %v480, %v600
  %v602 = vpop.f32.mrb[0].mxu0
  %603 = vmatprep.mubr.bf16.mxu0 0
  %604 = vmatmul.mubr.bf16.gmra.mrb[0].mxu0 %v413
  %v605 = vpop.f32.mrb[0].mxu0
  %v606 = vadd.f32 %v485, %v605
  %v607 = vpop.f32.mrb[0].mxu0
  %v608 = vpop.f32.mrb[0].mxu0
  %v609 = vadd.f32 %v488, %v608
  %v610 = vpop.f32.mrb[0].mxu0
  %611 = vmatprep.mubr.bf16.mxu0 0
  %612 = vmatmul.mubr.bf16.gmra.mrb[0].mxu0 %v416
  %v613 = vpop.f32.mrb[0].mxu0
  %v614 = vadd.f32 %v493, %v613
  %v615 = vpop.f32.mrb[0].mxu0
  %v616 = vpop.f32.mrb[0].mxu0
  %v617 = vadd.f32 %v496, %v616
  %v618 = vpop.f32.mrb[0].mxu0
  %619 = vmatprep.mubr.bf16.mxu0 0
  %620 = vmatmul.mubr.bf16.gmra.mrb[0].mxu0 %v419
  %v621 = vpop.f32.mrb[0].mxu0
  %v622 = vadd.f32 %v501, %v621
  %v623 = vpop.f32.mrb[0].mxu0
  %v624 = vpop.f32.mrb[0].mxu0
  %v625 = vadd.f32 %v504, %v624
  %v626 = vpop.f32.mrb[0].mxu0
  %627 = vmatprep.mubr.bf16.mxu0 0
  %628 = vmatmul.mubr.bf16.gmra.mrb[0].mxu0 %v422
  %v629 = vpop.f32.mrb[0].mxu0
  %v630 = vadd.f32 %v509, %v629
  %v631 = vpop.f32.mrb[0].mxu0
  %v632 = vpop.f32.mrb[0].mxu0
  %v633 = vadd.f32 %v512, %v632
  %v634 = vpop.f32.mrb[0].mxu0
  %635 = vmatprep.mubr.bf16.mxu0 0
  %636 = vmatmul.mubr.bf16.gmra.mrb[0].mxu0 %v425
  %v637 = vpop.f32.mrb[0].mxu0
  %v638 = vadd.f32 %v517, %v637
  %v639 = vpop.f32.mrb[0].mxu0
  %v640 = vpop.f32.mrb[0].mxu0
  %v641 = vadd.f32 %v520, %v640
  %v642 = vpop.f32.mrb[0].mxu0
  %643 = vmatprep.mubr.bf16.mxu0 0
  %644 = vmatmul.mubr.bf16.gmra.mrb[0].mxu0 %v428
  %v645 = vpop.f32.mrb[0].mxu0
  %v646 = vadd.f32 %v525, %v645
  %v647 = vpop.f32.mrb[0].mxu0
  %v648 = vpop.f32.mrb[0].mxu0
  %v649 = vadd.f32 %v528, %v648
  %v650 = vpop.f32.mrb[0].mxu0
  %651 = vmatprep.mubr.bf16.mxu0 0
  %652 = vmatmul.mubr.bf16.gmra.mrb[0].mxu0 %v431
  %v653 = vpop.f32.mrb[0].mxu0
  %v654 = vadd.f32 %v533, %v653
  %v655 = vpop.f32.mrb[0].mxu0
  %v656 = vpop.f32.mrb[0].mxu0
  %v657 = vadd.f32 %v536, %v656
  %v658 = vpop.f32.mrb[0].mxu0
  %659 = vmatprep.mubr.bf16.mxu0 0
  %660 = vmatmul.mubr.bf16.gmra.mrb[0].mxu0 %v434
  %v661 = vpop.f32.mrb[0].mxu0
  %v662 = vadd.f32 %v541, %v661
  %v663 = vpop.f32.mrb[0].mxu0
  %v664 = vpop.f32.mrb[0].mxu0
  %v665 = vadd.f32 %v544, %v664
  %v666 = vpop.f32.mrb[0].mxu0
  %667 = vmatprep.mubr.bf16.mxu0 0
  %668 = vmatmul.mubr.bf16.gmra.mrb[0].mxu0 %v437
  %v669 = vpop.f32.mrb[0].mxu0
  %v670 = vadd.f32 %v549, %v669
  %v671 = vpop.f32.mrb[0].mxu0
  %v672 = vpop.f32.mrb[0].mxu0
  %v673 = vadd.f32 %v552, %v672
  %v674 = vpop.f32.mrb[0].mxu0
  %675 = vmatprep.mubr.bf16.mxu0 0
  %676 = vmatmul.mubr.bf16.gmra.mrb[0].mxu0 %v440
  %v677 = vpop.f32.mrb[0].mxu0
  %v678 = vadd.f32 %v557, %v677
  %v679 = vpop.f32.mrb[0].mxu0
  %v680 = vpop.f32.mrb[0].mxu0
  %v681 = vadd.f32 %v560, %v680
  %v682 = vpop.f32.mrb[0].mxu0
  %683 = vdwg.mxu0
  %v684 = vmax.f32 %v598, 0.0
  %v685 = vmax.f32 %v601, 0.0
  %v686 = vmax.f32 %v606, 0.0
  %v687 = vmax.f32 %v609, 0.0
  %v688 = vmax.f32 %v614, 0.0
  %v689 = vmax.f32 %v617, 0.0
  %v690 = vmax.f32 %v622, 0.0
  %v691 = vmax.f32 %v625, 0.0
  %v692 = vmax.f32 %v630, 0.0
  %v693 = vmax.f32 %v633, 0.0
  %v694 = vmax.f32 %v638, 0.0
  %v695 = vmax.f32 %v641, 0.0
  %v696 = vmax.f32 %v646, 0.0
  %v697 = vmax.f32 %v649, 0.0
  %v698 = vmax.f32 %v654, 0.0
  %v699 = vmax.f32 %v657, 0.0
  %v700 = vmax.f32 %v662, 0.0
  %v701 = vmax.f32 %v665, 0.0
  %v702 = vmax.f32 %v670, 0.0
  %v703 = vmax.f32 %v673, 0.0
  %v704 = vmax.f32 %v678, 0.0
  %v705 = vmax.f32 %v681, 0.0
  %v706 = vpack.c.bf16 %v685, %v684
  %v707 = vpack.c.bf16 %v687, %v686
  %v708 = vpack.c.bf16 %v689, %v688
  %v709 = vpack.c.bf16 %v691, %v690
  %v710 = vpack.c.bf16 %v693, %v692
  %v711 = vpack.c.bf16 %v695, %v694
  %v712 = vpack.c.bf16 %v697, %v696
  %v713 = vpack.c.bf16 %v699, %v698
  %v714 = vpack.c.bf16 %v701, %v700
  %v715 = vpack.c.bf16 %v703, %v702
  %v716 = vpack.c.bf16 %v705, %v704
  %v717 = vld [vmem:[%s3] sm:$0xf]
  %v718 = vld [vmem:[%s3 + $0x4] sm:$0xf]
  %v719 = vld [vmem:[%s3 + $0x8] sm:$0xf]
  %v720 = vld [vmem:[%s3 + $0xc] sm:$0xf]
  %v721 = vld [vmem:[%s3 + $0x10] sm:$0xf]
  %v722 = vld [vmem:[%s3 + $0x14] sm:$0xf]
  %v723 = vld [vmem:[%s3 + $0x18] sm:$0xf]
  %v724 = vld [vmem:[%s3 + $0x1c] sm:$0xf]
  %v725 = vld [vmem:[%s3 + $0x20] sm:$0xf]
  %v726 = vld [vmem:[%s3 + $0x24] sm:$0xf]
  %v727 = vld [vmem:[%s3 + $0x28] sm:$0xf]
  %v728 = vld [vmem:[%s3 + $0x2c] sm:$0xf]
  %v729 = vld [vmem:[%s3 + $0x30] sm:$0xf]
  %v730 = vld [vmem:[%s3 + $0x34] sm:$0xf]
  %v731 = vld [vmem:[%s3 + $0x38] sm:$0xf]
  %v732 = vld [vmem:[%s3 + $0x3c] sm:$0xf]
  %v733 = vld [vmem:[%s4] sm:$0x1]
  %v735 = vlaneseq
  %v736 = vshrl.u32 %v735, 7
  %v737 = vsub.s32 0, %v736
  %v738 = vrot.slane %v733, %v737
  %v756 = vunpack.c.l.b16 %v717
  %v757 = vunpack.c.l.b16 %v718
  %v758 = vunpack.c.l.b16 %v719
  %v759 = vunpack.c.l.b16 %v720
  %v760 = vunpack.c.l.b16 %v721
  %v761 = vunpack.c.l.b16 %v722
  %v762 = vunpack.c.l.b16 %v723
  %v763 = vunpack.c.l.b16 %v724
  %v764 = vunpack.c.l.b16 %v725
  %v765 = vunpack.c.l.b16 %v726
  %v766 = vunpack.c.l.b16 %v727
  %v767 = vunpack.c.l.b16 %v728
  %v768 = vunpack.c.l.b16 %v729
  %v769 = vunpack.c.l.b16 %v730
  %v770 = vunpack.c.l.b16 %v731
  %v771 = vunpack.c.l.b16 %v732
  %v772 = vpack.c.b16 %v757, %v756
  %v773 = vpack.c.b16 %v759, %v758
  %v774 = vpack.c.b16 %v761, %v760
  %v775 = vpack.c.b16 %v763, %v762
  %v776 = vpack.c.b16 %v765, %v764
  %v777 = vpack.c.b16 %v767, %v766
  %v778 = vpack.c.b16 %v769, %v768
  %v779 = vpack.c.b16 %v771, %v770
  %788 = vmatprep.subr.bf16.mxu0 0
  %789 = vmatpush1.bf16.msra.mxu0 %v772
  %790 = vmatprep.subr.bf16.mxu0 0
  %791 = vmatpush1.bf16.msra.mxu0 %v773
  %792 = vmatprep.subr.bf16.mxu0 0
  %793 = vmatpush1.bf16.msra.mxu0 %v774
  %794 = vmatprep.subr.bf16.mxu0 0
  %795 = vmatpush1.bf16.msra.mxu0 %v775
  %796 = vmatprep.subr.bf16.mxu0 0
  %797 = vmatpush1.bf16.msra.mxu0 %v776
  %798 = vmatprep.subr.bf16.mxu0 0
  %799 = vmatpush1.bf16.msra.mxu0 %v777
  %800 = vmatprep.subr.bf16.mxu0 0
  %801 = vmatpush1.bf16.msra.mxu0 %v778
  %802 = vmatprep.subr.bf16.mxu0 0
  %803 = vmatpush1.bf16.msra.mxu0 %v779
  %804 = vmatprep.subr.bf16.mxu0 0
  %805 = vmatpush1.bf16.msra.mxu0 0
  %806 = vmatprep.subr.bf16.mxu0 0
  %807 = vmatpush1.bf16.msra.mxu0 0
  %808 = vmatprep.subr.bf16.mxu0 0
  %809 = vmatpush1.bf16.msra.mxu0 0
  %810 = vmatprep.subr.bf16.mxu0 0
  %811 = vmatpush1.bf16.msra.mxu0 0
  %812 = vmatprep.subr.bf16.mxu0 0
  %813 = vmatpush1.bf16.msra.mxu0 0
  %814 = vmatprep.subr.bf16.mxu0 0
  %815 = vmatpush1.bf16.msra.mxu0 0
  %816 = vmatprep.subr.bf16.mxu0 0
  %817 = vmatpush1.bf16.msra.mxu0 0
  %818 = vmatprep.subr.bf16.mxu0 0
  %819 = vmatpush1.bf16.msra.mxu0 0
  %820 = vmatprep.mubr.bf16.mxu0 0
  %821 = vmatmul.mubr.bf16.gmra.mrb[0].mxu0 %v706
  %v822 = vpop.f32.mrb[0].mxu0
  %v823 = vadd.f32 %v738, %v822
  %v824 = vpop.f32.mrb[0].mxu0
  %v825 = vpop.f32.mrb[0].mxu0
  %v826 = vadd.f32 %v738, %v825
  %v827 = vpop.f32.mrb[0].mxu0
  %828 = vmatprep.mubr.bf16.mxu0 0
  %829 = vmatmul.mubr.bf16.gmra.mrb[0].mxu0 %v707
  %v830 = vpop.f32.mrb[0].mxu0
  %v831 = vadd.f32 %v738, %v830
  %v832 = vpop.f32.mrb[0].mxu0
  %v833 = vpop.f32.mrb[0].mxu0
  %v834 = vadd.f32 %v738, %v833
  %v835 = vpop.f32.mrb[0].mxu0
  %836 = vmatprep.mubr.bf16.mxu0 0
  %837 = vmatmul.mubr.bf16.gmra.mrb[0].mxu0 %v708
  %v838 = vpop.f32.mrb[0].mxu0
  %v839 = vadd.f32 %v738, %v838
  %v840 = vpop.f32.mrb[0].mxu0
  %v841 = vpop.f32.mrb[0].mxu0
  %v842 = vadd.f32 %v738, %v841
  %v843 = vpop.f32.mrb[0].mxu0
  %844 = vmatprep.mubr.bf16.mxu0 0
  %845 = vmatmul.mubr.bf16.gmra.mrb[0].mxu0 %v709
  %v846 = vpop.f32.mrb[0].mxu0
  %v847 = vadd.f32 %v738, %v846
  %v848 = vpop.f32.mrb[0].mxu0
  %v849 = vpop.f32.mrb[0].mxu0
  %v850 = vadd.f32 %v738, %v849
  %v851 = vpop.f32.mrb[0].mxu0
  %852 = vmatprep.mubr.bf16.mxu0 0
  %853 = vmatmul.mubr.bf16.gmra.mrb[0].mxu0 %v710
  %v854 = vpop.f32.mrb[0].mxu0
  %v855 = vadd.f32 %v738, %v854
  %v856 = vpop.f32.mrb[0].mxu0
  %v857 = vpop.f32.mrb[0].mxu0
  %v858 = vadd.f32 %v738, %v857
  %v859 = vpop.f32.mrb[0].mxu0
  %860 = vmatprep.mubr.bf16.mxu0 0
  %861 = vmatmul.mubr.bf16.gmra.mrb[0].mxu0 %v711
  %v862 = vpop.f32.mrb[0].mxu0
  %v863 = vadd.f32 %v738, %v862
  %v864 = vpop.f32.mrb[0].mxu0
  %v865 = vpop.f32.mrb[0].mxu0
  %v866 = vadd.f32 %v738, %v865
  %v867 = vpop.f32.mrb[0].mxu0
  %868 = vmatprep.mubr.bf16.mxu0 0
  %869 = vmatmul.mubr.bf16.gmra.mrb[0].mxu0 %v712
  %v870 = vpop.f32.mrb[0].mxu0
  %v871 = vadd.f32 %v738, %v870
  %v872 = vpop.f32.mrb[0].mxu0
  %v873 = vpop.f32.mrb[0].mxu0
  %v874 = vadd.f32 %v738, %v873
  %v875 = vpop.f32.mrb[0].mxu0
  %876 = vmatprep.mubr.bf16.mxu0 0
  %877 = vmatmul.mubr.bf16.gmra.mrb[0].mxu0 %v713
  %v878 = vpop.f32.mrb[0].mxu0
  %v879 = vadd.f32 %v738, %v878
  %v880 = vpop.f32.mrb[0].mxu0
  %v881 = vpop.f32.mrb[0].mxu0
  %v882 = vadd.f32 %v738, %v881
  %v883 = vpop.f32.mrb[0].mxu0
  %884 = vmatprep.mubr.bf16.mxu0 0
  %885 = vmatmul.mubr.bf16.gmra.mrb[0].mxu0 %v714
  %v886 = vpop.f32.mrb[0].mxu0
  %v887 = vadd.f32 %v738, %v886
  %v888 = vpop.f32.mrb[0].mxu0
  %v889 = vpop.f32.mrb[0].mxu0
  %v890 = vadd.f32 %v738, %v889
  %v891 = vpop.f32.mrb[0].mxu0
  %892 = vmatprep.mubr.bf16.mxu0 0
  %893 = vmatmul.mubr.bf16.gmra.mrb[0].mxu0 %v715
  %v894 = vpop.f32.mrb[0].mxu0
  %v895 = vadd.f32 %v738, %v894
  %v896 = vpop.f32.mrb[0].mxu0
  %v897 = vpop.f32.mrb[0].mxu0
  %v898 = vadd.f32 %v738, %v897
  %v899 = vpop.f32.mrb[0].mxu0
  %900 = vmatprep.mubr.bf16.mxu0 0
  %901 = vmatmul.mubr.bf16.gmra.mrb[0].mxu0 %v716
  %v902 = vpop.f32.mrb[0].mxu0
  %v903 = vadd.f32 %v738, %v902
  %v904 = vpop.f32.mrb[0].mxu0
  %v905 = vpop.f32.mrb[0].mxu0
  %v906 = vadd.f32 %v738, %v905
  %v907 = vpop.f32.mrb[0].mxu0
  %908 = vdwg.mxu0
  %v909 = vmax.f32 %v823, 0.0
  %v910 = vmax.f32 %v826, 0.0
  %v911 = vmax.f32 %v831, 0.0
  %v912 = vmax.f32 %v834, 0.0
  %v913 = vmax.f32 %v839, 0.0
  %v914 = vmax.f32 %v842, 0.0
  %v915 = vmax.f32 %v847, 0.0
  %v916 = vmax.f32 %v850, 0.0
  %v917 = vmax.f32 %v855, 0.0
  %v918 = vmax.f32 %v858, 0.0
  %v919 = vmax.f32 %v863, 0.0
  %v920 = vmax.f32 %v866, 0.0
  %v921 = vmax.f32 %v871, 0.0
  %v922 = vmax.f32 %v874, 0.0
  %v923 = vmax.f32 %v879, 0.0
  %v924 = vmax.f32 %v882, 0.0
  %v925 = vmax.f32 %v887, 0.0
  %v926 = vmax.f32 %v890, 0.0
  %v927 = vmax.f32 %v895, 0.0
  %v928 = vmax.f32 %v898, 0.0
  %v929 = vmax.f32 %v903, 0.0
  %v930 = vmax.f32 %v906, 0.0
  %vm933 = vcmask 1044480
  %v934 = vrot.slane %v910, 3
  %v935 = vrot.slane %v911, 3
  %v936 = vsel %vm933, %v934, %v935
  %937 = vrot.lane.b32.xlu0 %v936, 16
  %v938 = vpop.permute.xlu0 %937
  %939 = vrot.lane.b32.xlu0 %v935, 16
  %v940 = vpop.permute.xlu0 %939
  %vm944 = vcmask 1041408
  %v945 = vrot.slane %v911, 6
  %v946 = vrot.slane %v912, 6
  %v947 = vsel %vm944, %v945, %v946
  %948 = vrot.lane.b32.xlu0 %v947, 32
  %v949 = vpop.permute.xlu0 %948
  %950 = vrot.lane.b32.xlu0 %v946, 32
  %v951 = vpop.permute.xlu0 %950
  %vm956 = vcmask 1046528
  %v957 = vrot.slane %v913, 1
  %v958 = vrot.slane %v914, 1
  %v959 = vsel %vm956, %v957, %v958
  %960 = vrot.lane.b32.xlu0 %v959, 48
  %v961 = vpop.permute.xlu0 %960
  %962 = vrot.lane.b32.xlu0 %v958, 48
  %v963 = vpop.permute.xlu0 %962
  %vm967 = vcmask 1043456
  %v968 = vrot.slane %v914, 4
  %v969 = vrot.slane %v915, 4
  %v970 = vsel %vm967, %v968, %v969
  %971 = vrot.lane.b32.xlu0 %v970, 64
  %v972 = vpop.permute.xlu0 %971
  %973 = vrot.lane.b32.xlu0 %v969, 64
  %v974 = vpop.permute.xlu0 %973
  %vm979 = vcmask 1040384
  %v980 = vrot.slane %v915, 7
  %v981 = vrot.slane %v916, 7
  %v982 = vsel %vm979, %v980, %v981
  %v983 = vrot.slane %v917, 7
  %v984 = vsel %vm979, %v981, %v983
  %985 = vrot.lane.b32.xlu0 %v982, 80
  %v986 = vpop.permute.xlu0 %985
  %987 = vrot.lane.b32.xlu0 %v984, 80
  %v988 = vpop.permute.xlu0 %987
  %vm992 = vcmask 1045504
  %v993 = vrot.slane %v917, 2
  %v994 = vrot.slane %v918, 2
  %v995 = vsel %vm992, %v993, %v994
  %996 = vrot.lane.b32.xlu0 %v995, 96
  %v997 = vpop.permute.xlu0 %996
  %998 = vrot.lane.b32.xlu0 %v994, 96
  %v999 = vpop.permute.xlu0 %998
  %vm1003 = vcmask 1042432
  %v1004 = vrot.slane %v918, 5
  %v1005 = vrot.slane %v919, 5
  %v1006 = vsel %vm1003, %v1004, %v1005
  %1007 = vrot.lane.b32.xlu0 %v1006, 112
  %v1008 = vpop.permute.xlu0 %1007
  %1009 = vrot.lane.b32.xlu0 %v1005, 112
  %v1010 = vpop.permute.xlu0 %1009
  %v1015 = vrot.slane %v921, 3
  %v1016 = vrot.slane %v922, 3
  %v1017 = vsel %vm933, %v1015, %v1016
  %1018 = vrot.lane.b32.xlu0 %v1017, 16
  %v1019 = vpop.permute.xlu0 %1018
  %1020 = vrot.lane.b32.xlu0 %v1016, 16
  %v1021 = vpop.permute.xlu0 %1020
  %v1025 = vrot.slane %v922, 6
  %v1026 = vrot.slane %v923, 6
  %v1027 = vsel %vm944, %v1025, %v1026
  %1028 = vrot.lane.b32.xlu0 %v1027, 32
  %v1029 = vpop.permute.xlu0 %1028
  %1030 = vrot.lane.b32.xlu0 %v1026, 32
  %v1031 = vpop.permute.xlu0 %1030
  %v1036 = vrot.slane %v924, 1
  %v1037 = vrot.slane %v925, 1
  %v1038 = vsel %vm956, %v1036, %v1037
  %1039 = vrot.lane.b32.xlu0 %v1038, 48
  %v1040 = vpop.permute.xlu0 %1039
  %1041 = vrot.lane.b32.xlu0 %v1037, 48
  %v1042 = vpop.permute.xlu0 %1041
  %v1046 = vrot.slane %v925, 4
  %v1047 = vrot.slane %v926, 4
  %v1048 = vsel %vm967, %v1046, %v1047
  %1049 = vrot.lane.b32.xlu0 %v1048, 64
  %v1050 = vpop.permute.xlu0 %1049
  %1051 = vrot.lane.b32.xlu0 %v1047, 64
  %v1052 = vpop.permute.xlu0 %1051
  %v1057 = vrot.slane %v926, 7
  %v1058 = vrot.slane %v927, 7
  %v1059 = vsel %vm979, %v1057, %v1058
  %v1060 = vrot.slane %v928, 7
  %v1061 = vsel %vm979, %v1058, %v1060
  %1062 = vrot.lane.b32.xlu0 %v1059, 80
  %v1063 = vpop.permute.xlu0 %1062
  %1064 = vrot.lane.b32.xlu0 %v1061, 80
  %v1065 = vpop.permute.xlu0 %1064
  %v1069 = vrot.slane %v928, 2
  %v1070 = vrot.slane %v929, 2
  %v1071 = vsel %vm992, %v1069, %v1070
  %1072 = vrot.lane.b32.xlu0 %v1071, 96
  %v1073 = vpop.permute.xlu0 %1072
  %1074 = vrot.lane.b32.xlu0 %v1070, 96
  %v1075 = vpop.permute.xlu0 %1074
  %v1079 = vrot.slane %v929, 5
  %v1080 = vrot.slane %v930, 5
  %v1081 = vsel %vm1003, %v1079, %v1080
  %1082 = vrot.lane.b32.xlu0 %v1081, 112
  %v1083 = vpop.permute.xlu0 %1082
  %1084 = vrot.lane.b32.xlu0 %v1080, 112
  %v1085 = vpop.permute.xlu0 %1084
  %v1088 = vsel %vm408, %v909, %v938
  %v1089 = vsel %vm408, %v910, %v940
  %vm1090 = vcmask 261120
  %v1091 = vsel %vm1090, %v1088, %v949
  %v1092 = vsel %vm1090, %v1089, %v951
  %vm1093 = vcmask 392192
  %v1094 = vsel %vm1093, %v1091, %v961
  %v1095 = vsel %vm1093, %v1092, %v963
  %vm1096 = vcmask 523264
  %v1097 = vsel %vm1096, %v1094, %v972
  %v1098 = vsel %vm1096, %v1095, %v974
  %vm1099 = vcmask 654336
  %v1100 = vsel %vm1099, %v1097, %v986
  %v1101 = vsel %vm1099, %v1098, %v988
  %vm1102 = vcmask 785408
  %v1103 = vsel %vm1102, %v1100, %v997
  %v1104 = vsel %vm1102, %v1101, %v999
  %vm1105 = vcmask 916480
  %v1106 = vsel %vm1105, %v1103, %v1008
  %v1107 = vsel %vm1105, %v1104, %v1010
  %v1108 = vsel %vm408, %v920, %v1019
  %v1109 = vsel %vm408, %v921, %v1021
  %v1110 = vsel %vm1090, %v1108, %v1029
  %v1111 = vsel %vm1090, %v1109, %v1031
  %v1112 = vsel %vm1093, %v1110, %v1040
  %v1113 = vsel %vm1093, %v1111, %v1042
  %v1114 = vsel %vm1096, %v1112, %v1050
  %v1115 = vsel %vm1096, %v1113, %v1052
  %v1116 = vsel %vm1099, %v1114, %v1063
  %v1117 = vsel %vm1099, %v1115, %v1065
  %v1118 = vsel %vm1102, %v1116, %v1073
  %v1119 = vsel %vm1102, %v1117, %v1075
  %v1120 = vsel %vm1105, %v1118, %v1083
  %v1121 = vsel %vm1105, %v1119, %v1085
  %v1122 = vrot.slane %v913, 6
  %v1123 = vsel %vm944, %v946, %v1122
  %1124 = vrot.lane.b32.xlu0 %v1123, 32
  %v1125 = vpop.permute.xlu0 %1124
  %v1127 = vsel %vm1090, %v1089, %v1125
  %v1128 = vsel %vm1093, %v1127, %v963
  %v1131 = vrot.slane %v1094, 1
  %v1132 = vrot.slane %v1128, 1
  %v1133 = vsel %vm956, %v1131, %v1132
  %v1136 = vpack.c.bf16 %v1107, %v1106
  %v1137 = vpack.c.bf16 %v1121, %v1120
  %v1138 = vpack.c.bf16 %v1132, %v1133
  %v1139 = vld [vmem:[%s5] sm:$0xf]
  %v1140 = vld [vmem:[%s5 + $0x4] sm:$0xf]
  %v1141 = vld [vmem:[%s5 + $0x8] sm:$0xf]
  %v1142 = vld [vmem:[%s5 + $0xc] sm:$0xf]
  %v1143 = vld [vmem:[%s5 + $0x10] sm:$0xf]
  %v1144 = vld [vmem:[%s5 + $0x14] sm:$0xf]
  %v1145 = vld [vmem:[%s5 + $0x18] sm:$0xf]
  %v1146 = vld [vmem:[%s5 + $0x1c] sm:$0xf]
  %v1147 = vld [vmem:[%s5 + $0x20] sm:$0xf]
  %v1148 = vld [vmem:[%s5 + $0x24] sm:$0xf]
  %v1149 = vld [vmem:[%s5 + $0x28] sm:$0xf]
  %v1150 = vld [vmem:[%s5 + $0x2c] sm:$0xf]
  %v1151 = vld [vmem:[%s5 + $0x30] sm:$0xf]
  %v1152 = vld [vmem:[%s5 + $0x34] sm:$0xf]
  %v1153 = vld [vmem:[%s5 + $0x38] sm:$0xf]
  %v1154 = vld [vmem:[%s5 + $0x3c] sm:$0xf]
  %v1155 = vld [vmem:[%s5 + $0x40] sm:$0xf]
  %v1156 = vld [vmem:[%s5 + $0x44] sm:$0xf]
  %v1157 = vld [vmem:[%s5 + $0x48] sm:$0xf]
  %v1158 = vld [vmem:[%s5 + $0x4c] sm:$0xf]
  %v1159 = vld [vmem:[%s5 + $0x50] sm:$0xf]
  %v1160 = vld [vmem:[%s5 + $0x54] sm:$0xf]
  %v1161 = vld [vmem:[%s5 + $0x58] sm:$0xf]
  %v1162 = vld [vmem:[%s5 + $0x5c] sm:$0xf]
  %v1163 = vld [vmem:[%s5 + $0x60] sm:$0xf]
  %v1164 = vld [vmem:[%s5 + $0x64] sm:$0xf]
  %v1165 = vld [vmem:[%s5 + $0x68] sm:$0xf]
  %v1166 = vld [vmem:[%s5 + $0x6c] sm:$0xf]
  %v1167 = vld [vmem:[%s5 + $0x70] sm:$0xf]
  %v1168 = vld [vmem:[%s5 + $0x74] sm:$0xf]
  %v1169 = vld [vmem:[%s5 + $0x78] sm:$0xf]
  %v1170 = vld [vmem:[%s5 + $0x7c] sm:$0xf]
  %v1171 = vld [vmem:[%s5 + $0x80] sm:$0xf]
  %v1172 = vld [vmem:[%s5 + $0x84] sm:$0xf]
  %v1173 = vld [vmem:[%s5 + $0x88] sm:$0xf]
  %v1174 = vld [vmem:[%s5 + $0x8c] sm:$0xf]
  %v1175 = vld [vmem:[%s5 + $0x90] sm:$0xf]
  %v1176 = vld [vmem:[%s5 + $0x94] sm:$0xf]
  %v1177 = vld [vmem:[%s5 + $0x98] sm:$0xf]
  %v1178 = vld [vmem:[%s5 + $0x9c] sm:$0xf]
  %v1179 = vld [vmem:[%s6] sm:$0x1]
  %v1181 = vlaneseq
  %v1182 = vshrl.u32 %v1181, 7
  %v1183 = vsub.s32 0, %v1182
  %v1184 = vrot.slane %v1179, %v1183
  %v1226 = vunpack.c.l.b16 %v1139
  %v1227 = vunpack.c.l.b16 %v1140
  %v1228 = vunpack.c.l.b16 %v1141
  %v1229 = vunpack.c.l.b16 %v1142
  %v1230 = vunpack.c.l.b16 %v1143
  %v1231 = vunpack.c.l.b16 %v1144
  %v1232 = vunpack.c.l.b16 %v1145
  %v1233 = vunpack.c.l.b16 %v1146
  %v1234 = vunpack.c.l.b16 %v1147
  %v1235 = vunpack.c.l.b16 %v1148
  %v1236 = vunpack.c.l.b16 %v1149
  %v1237 = vunpack.c.l.b16 %v1150
  %v1238 = vunpack.c.l.b16 %v1151
  %v1239 = vunpack.c.l.b16 %v1152
  %v1240 = vunpack.c.l.b16 %v1153
  %v1241 = vunpack.c.l.b16 %v1154
  %v1242 = vunpack.c.l.b16 %v1155
  %v1243 = vunpack.c.l.b16 %v1156
  %v1244 = vunpack.c.l.b16 %v1157
  %v1245 = vunpack.c.l.b16 %v1158
  %v1246 = vunpack.c.l.b16 %v1159
  %v1247 = vunpack.c.l.b16 %v1160
  %v1248 = vunpack.c.l.b16 %v1161
  %v1249 = vunpack.c.l.b16 %v1162
  %v1250 = vunpack.c.l.b16 %v1163
  %v1251 = vunpack.c.l.b16 %v1164
  %v1252 = vunpack.c.l.b16 %v1165
  %v1253 = vunpack.c.l.b16 %v1166
  %v1254 = vunpack.c.l.b16 %v1167
  %v1255 = vunpack.c.l.b16 %v1168
  %v1256 = vunpack.c.l.b16 %v1169
  %v1257 = vunpack.c.l.b16 %v1170
  %v1258 = vunpack.c.l.b16 %v1171
  %v1259 = vunpack.c.l.b16 %v1172
  %v1260 = vunpack.c.l.b16 %v1173
  %v1261 = vunpack.c.l.b16 %v1174
  %v1262 = vunpack.c.l.b16 %v1175
  %v1263 = vunpack.c.l.b16 %v1176
  %v1264 = vunpack.c.l.b16 %v1177
  %v1265 = vunpack.c.l.b16 %v1178
  %v1266 = vpack.c.b16 %v1227, %v1226
  %v1267 = vpack.c.b16 %v1229, %v1228
  %v1268 = vpack.c.b16 %v1231, %v1230
  %v1269 = vpack.c.b16 %v1233, %v1232
  %v1270 = vpack.c.b16 %v1235, %v1234
  %v1271 = vpack.c.b16 %v1237, %v1236
  %v1272 = vpack.c.b16 %v1239, %v1238
  %v1273 = vpack.c.b16 %v1241, %v1240
  %v1274 = vpack.c.b16 %v1243, %v1242
  %v1275 = vpack.c.b16 %v1245, %v1244
  %v1276 = vpack.c.b16 %v1247, %v1246
  %v1277 = vpack.c.b16 %v1249, %v1248
  %v1278 = vpack.c.b16 %v1251, %v1250
  %v1279 = vpack.c.b16 %v1253, %v1252
  %v1280 = vpack.c.b16 %v1255, %v1254
  %v1281 = vpack.c.b16 %v1257, %v1256
  %v1282 = vpack.c.b16 %v1259, %v1258
  %v1283 = vpack.c.b16 %v1261, %v1260
  %v1284 = vpack.c.b16 %v1263, %v1262
  %v1285 = vpack.c.b16 %v1265, %v1264
  %v1307 = vsel %vm1096, %v1138, 0
  %1309 = vmatprep.subr.bf16.mxu0 0
  %1310 = vmatpush1.bf16.msra.mxu0 %v1266
  %1311 = vmatprep.subr.bf16.mxu0 0
  %1312 = vmatpush1.bf16.msra.mxu0 %v1267
  %1313 = vmatprep.subr.bf16.mxu0 0
  %1314 = vmatpush1.bf16.msra.mxu0 %v1268
  %1315 = vmatprep.subr.bf16.mxu0 0
  %1316 = vmatpush1.bf16.msra.mxu0 %v1269
  %1317 = vmatprep.subr.bf16.mxu0 0
  %1318 = vmatpush1.bf16.msra.mxu0 %v1270
  %1319 = vmatprep.subr.bf16.mxu0 0
  %1320 = vmatpush1.bf16.msra.mxu0 %v1271
  %1321 = vmatprep.subr.bf16.mxu0 0
  %1322 = vmatpush1.bf16.msra.mxu0 %v1272
  %1323 = vmatprep.subr.bf16.mxu0 0
  %1324 = vmatpush1.bf16.msra.mxu0 %v1273
  %1325 = vmatprep.subr.bf16.mxu0 0
  %1326 = vmatpush1.bf16.msra.mxu0 %v1274
  %1327 = vmatprep.subr.bf16.mxu0 0
  %1328 = vmatpush1.bf16.msra.mxu0 %v1275
  %1329 = vmatprep.subr.bf16.mxu0 0
  %1330 = vmatpush1.bf16.msra.mxu0 %v1276
  %1331 = vmatprep.subr.bf16.mxu0 0
  %1332 = vmatpush1.bf16.msra.mxu0 %v1277
  %1333 = vmatprep.subr.bf16.mxu0 0
  %1334 = vmatpush1.bf16.msra.mxu0 %v1278
  %1335 = vmatprep.subr.bf16.mxu0 0
  %1336 = vmatpush1.bf16.msra.mxu0 %v1279
  %1337 = vmatprep.subr.bf16.mxu0 0
  %1338 = vmatpush1.bf16.msra.mxu0 %v1280
  %1339 = vmatprep.subr.bf16.mxu0 0
  %1340 = vmatpush1.bf16.msra.mxu0 %v1281
  %1341 = vmatprep.mubr.bf16.mxu0 %v1137
  %1342 = vmatmul.mubr.bf16.gmra.mrb[0].mxu0 %v1136
  %v1343 = vpop.f32.mrb[0].mxu0
  %v1344 = vadd.f32 %v1184, %v1343
  %v1345 = vpop.f32.mrb[0].mxu0
  %v1346 = vpop.f32.mrb[0].mxu0
  %v1347 = vadd.f32 %v1184, %v1346
  %v1348 = vpop.f32.mrb[0].mxu0
  %1349 = vdwg.mxu0
  %1350 = vmatprep.subr.bf16.mxu0 0
  %1351 = vmatpush1.bf16.msra.mxu0 %v1282
  %1352 = vmatprep.subr.bf16.mxu0 0
  %1353 = vmatpush1.bf16.msra.mxu0 %v1283
  %1354 = vmatprep.subr.bf16.mxu0 0
  %1355 = vmatpush1.bf16.msra.mxu0 %v1284
  %1356 = vmatprep.subr.bf16.mxu0 0
  %1357 = vmatpush1.bf16.msra.mxu0 %v1285
  %1358 = vmatprep.subr.bf16.mxu0 0
  %1359 = vmatpush1.bf16.msra.mxu0 0
  %1360 = vmatprep.subr.bf16.mxu0 0
  %1361 = vmatpush1.bf16.msra.mxu0 0
  %1362 = vmatprep.subr.bf16.mxu0 0
  %1363 = vmatpush1.bf16.msra.mxu0 0
  %1364 = vmatprep.subr.bf16.mxu0 0
  %1365 = vmatpush1.bf16.msra.mxu0 0
  %1366 = vmatprep.subr.bf16.mxu0 0
  %1367 = vmatpush1.bf16.msra.mxu0 0
  %1368 = vmatprep.subr.bf16.mxu0 0
  %1369 = vmatpush1.bf16.msra.mxu0 0
  %1370 = vmatprep.subr.bf16.mxu0 0
  %1371 = vmatpush1.bf16.msra.mxu0 0
  %1372 = vmatprep.subr.bf16.mxu0 0
  %1373 = vmatpush1.bf16.msra.mxu0 0
  %1374 = vmatprep.subr.bf16.mxu0 0
  %1375 = vmatpush1.bf16.msra.mxu0 0
  %1376 = vmatprep.subr.bf16.mxu0 0
  %1377 = vmatpush1.bf16.msra.mxu0 0
  %1378 = vmatprep.subr.bf16.mxu0 0
  %1379 = vmatpush1.bf16.msra.mxu0 0
  %1380 = vmatprep.subr.bf16.mxu0 0
  %1381 = vmatpush1.bf16.msra.mxu0 0
  %1382 = vmatprep.mubr.bf16.mxu0 0
  %1383 = vmatmul.mubr.bf16.gmra.mrb[0].mxu0 %v1307
  %v1384 = vpop.f32.mrb[0].mxu0
  %v1385 = vadd.f32 %v1344, %v1384
  %v1386 = vpop.f32.mrb[0].mxu0
  %v1387 = vpop.f32.mrb[0].mxu0
  %v1388 = vadd.f32 %v1347, %v1387
  %v1389 = vpop.f32.mrb[0].mxu0
  %1390 = vdwg.mxu0
  %v1391 = vmax.f32 %v1385, 0.0
  %v1392 = vmax.f32 %v1388, 0.0
  %v1395 = vrot.slane %v1391, 1
  %v1396 = vrot.slane %v1392, 1
  %v1397 = vsel %vm956, %v1395, %v1396
  %v1400 = vpack.c.bf16 %v1392, %v1391
  %v1401 = vpack.c.bf16 %v1396, %v1397
  %v1402 = vld [vmem:[%s7] sm:$0xf]
  %v1403 = vld [vmem:[%s7 + $0x4] sm:$0xf]
  %v1404 = vld [vmem:[%s7 + $0x8] sm:$0xf]
  %v1405 = vld [vmem:[%s7 + $0xc] sm:$0xf]
  %v1406 = vld [vmem:[%s7 + $0x10] sm:$0xf]
  %v1407 = vld [vmem:[%s7 + $0x14] sm:$0xf]
  %v1408 = vld [vmem:[%s7 + $0x18] sm:$0xf]
  %v1409 = vld [vmem:[%s7 + $0x1c] sm:$0xf]
  %v1410 = vld [vmem:[%s7 + $0x20] sm:$0xf]
  %v1411 = vld [vmem:[%s7 + $0x24] sm:$0xf]
  %v1412 = vld [vmem:[%s7 + $0x28] sm:$0xf]
  %v1413 = vld [vmem:[%s7 + $0x2c] sm:$0xf]
  %v1414 = vld [vmem:[%s7 + $0x30] sm:$0xf]
  %v1415 = vld [vmem:[%s7 + $0x34] sm:$0xf]
  %v1416 = vld [vmem:[%s7 + $0x38] sm:$0xf]
  %v1417 = vld [vmem:[%s7 + $0x3c] sm:$0xf]
  %v1418 = vld [vmem:[%s7 + $0x40] sm:$0xf]
  %v1419 = vld [vmem:[%s7 + $0x44] sm:$0xf]
  %v1420 = vld [vmem:[%s7 + $0x48] sm:$0xf]
  %v1421 = vld [vmem:[%s7 + $0x4c] sm:$0xf]
  %v1422 = vld [vmem:[%s7 + $0x50] sm:$0xf]
  %v1423 = vld [vmem:[%s7 + $0x54] sm:$0xf]
  %v1424 = vld [vmem:[%s7 + $0x58] sm:$0xf]
  %v1425 = vld [vmem:[%s7 + $0x5c] sm:$0xf]
  %v1426 = vld [vmem:[%s7 + $0x60] sm:$0xf]
  %v1427 = vld [vmem:[%s7 + $0x64] sm:$0xf]
  %v1428 = vld [vmem:[%s7 + $0x68] sm:$0xf]
  %v1429 = vld [vmem:[%s7 + $0x6c] sm:$0xf]
  %v1430 = vld [vmem:[%s7 + $0x70] sm:$0xf]
  %v1431 = vld [vmem:[%s7 + $0x74] sm:$0xf]
  %v1432 = vld [vmem:[%s7 + $0x78] sm:$0xf]
  %v1433 = vld [vmem:[%s7 + $0x7c] sm:$0xf]
  %v1434 = vld [vmem:[%s8] sm:$0x1]
  %v1436 = vlaneseq
  %v1437 = vshrl.u32 %v1436, 7
  %v1438 = vsub.s32 0, %v1437
  %v1439 = vrot.slane %v1434, %v1438
  %v1473 = vunpack.c.l.b16 %v1402
  %v1474 = vunpack.c.l.b16 %v1403
  %v1475 = vunpack.c.l.b16 %v1404
  %v1476 = vunpack.c.l.b16 %v1405
  %v1477 = vunpack.c.l.b16 %v1406
  %v1478 = vunpack.c.l.b16 %v1407
  %v1479 = vunpack.c.l.b16 %v1408
  %v1480 = vunpack.c.l.b16 %v1409
  %v1481 = vunpack.c.l.b16 %v1410
  %v1482 = vunpack.c.l.b16 %v1411
  %v1483 = vunpack.c.l.b16 %v1412
  %v1484 = vunpack.c.l.b16 %v1413
  %v1485 = vunpack.c.l.b16 %v1414
  %v1486 = vunpack.c.l.b16 %v1415
  %v1487 = vunpack.c.l.b16 %v1416
  %v1488 = vunpack.c.l.b16 %v1417
  %v1489 = vunpack.c.l.b16 %v1418
  %v1490 = vunpack.c.l.b16 %v1419
  %v1491 = vunpack.c.l.b16 %v1420
  %v1492 = vunpack.c.l.b16 %v1421
  %v1493 = vunpack.c.l.b16 %v1422
  %v1494 = vunpack.c.l.b16 %v1423
  %v1495 = vunpack.c.l.b16 %v1424
  %v1496 = vunpack.c.l.b16 %v1425
  %v1497 = vunpack.c.l.b16 %v1426
  %v1498 = vunpack.c.l.b16 %v1427
  %v1499 = vunpack.c.l.b16 %v1428
  %v1500 = vunpack.c.l.b16 %v1429
  %v1501 = vunpack.c.l.b16 %v1430
  %v1502 = vunpack.c.l.b16 %v1431
  %v1503 = vunpack.c.l.b16 %v1432
  %v1504 = vunpack.c.l.b16 %v1433
  %v1505 = vpack.c.b16 %v1474, %v1473
  %v1506 = vpack.c.b16 %v1476, %v1475
  %v1507 = vpack.c.b16 %v1478, %v1477
  %v1508 = vpack.c.b16 %v1480, %v1479
  %v1509 = vpack.c.b16 %v1482, %v1481
  %v1510 = vpack.c.b16 %v1484, %v1483
  %v1511 = vpack.c.b16 %v1486, %v1485
  %v1512 = vpack.c.b16 %v1488, %v1487
  %v1513 = vpack.c.b16 %v1490, %v1489
  %v1514 = vpack.c.b16 %v1492, %v1491
  %v1515 = vpack.c.b16 %v1494, %v1493
  %v1516 = vpack.c.b16 %v1496, %v1495
  %v1517 = vpack.c.b16 %v1498, %v1497
  %v1518 = vpack.c.b16 %v1500, %v1499
  %v1519 = vpack.c.b16 %v1502, %v1501
  %v1520 = vpack.c.b16 %v1504, %v1503
  %1537 = vmatprep.subr.bf16.mxu0 0
  %1538 = vmatpush1.bf16.msra.mxu0 %v1505
  %1539 = vmatprep.subr.bf16.mxu0 0
  %1540 = vmatpush1.bf16.msra.mxu0 %v1506
  %1541 = vmatprep.subr.bf16.mxu0 0
  %1542 = vmatpush1.bf16.msra.mxu0 %v1507
  %1543 = vmatprep.subr.bf16.mxu0 0
  %1544 = vmatpush1.bf16.msra.mxu0 %v1508
  %1545 = vmatprep.subr.bf16.mxu0 0
  %1546 = vmatpush1.bf16.msra.mxu0 %v1509
  %1547 = vmatprep.subr.bf16.mxu0 0
  %1548 = vmatpush1.bf16.msra.mxu0 %v1510
  %1549 = vmatprep.subr.bf16.mxu0 0
  %1550 = vmatpush1.bf16.msra.mxu0 %v1511
  %1551 = vmatprep.subr.bf16.mxu0 0
  %1552 = vmatpush1.bf16.msra.mxu0 %v1512
  %1553 = vmatprep.subr.bf16.mxu0 0
  %1554 = vmatpush1.bf16.msra.mxu0 %v1513
  %1555 = vmatprep.subr.bf16.mxu0 0
  %1556 = vmatpush1.bf16.msra.mxu0 %v1514
  %1557 = vmatprep.subr.bf16.mxu0 0
  %1558 = vmatpush1.bf16.msra.mxu0 %v1515
  %1559 = vmatprep.subr.bf16.mxu0 0
  %1560 = vmatpush1.bf16.msra.mxu0 %v1516
  %1561 = vmatprep.subr.bf16.mxu0 0
  %1562 = vmatpush1.bf16.msra.mxu0 %v1517
  %1563 = vmatprep.subr.bf16.mxu0 0
  %1564 = vmatpush1.bf16.msra.mxu0 %v1518
  %1565 = vmatprep.subr.bf16.mxu0 0
  %1566 = vmatpush1.bf16.msra.mxu0 %v1519
  %1567 = vmatprep.subr.bf16.mxu0 0
  %1568 = vmatpush1.bf16.msra.mxu0 %v1520
  %1569 = vmatprep.mubr.bf16.mxu0 %v1401
  %1570 = vmatmul.mubr.bf16.gmra.mrb[0].mxu0 %v1400
  %v1571 = vpop.f32.mrb[0].mxu0
  %v1572 = vadd.f32 %v1439, %v1571
  %v1573 = vpop.f32.mrb[0].mxu0
  %v1574 = vpop.f32.mrb[0].mxu0
  %v1575 = vadd.f32 %v1439, %v1574
  %v1576 = vpop.f32.mrb[0].mxu0
  %1577 = vdwg.mxu0
  %v1578 = vmax.f32 %v1572, 0.0
  %v1579 = vmax.f32 %v1575, 0.0
  %v1582 = vrot.slane %v1578, 1
  %v1583 = vrot.slane %v1579, 1
  %v1584 = vsel %vm956, %v1582, %v1583
  %v1586 = vpack.c.bf16 %v1578, %v1578
  %v1587 = vpack.c.bf16 %v1584, %v1584
  %v1588 = vld [vmem:[%s9] sm:$0xf]
  %v1589 = vld [vmem:[%s9 + $0x4] sm:$0xf]
  %v1590 = vld [vmem:[%s9 + $0x8] sm:$0xf]
  %v1591 = vld [vmem:[%s9 + $0xc] sm:$0xf]
  %v1592 = vld [vmem:[%s9 + $0x10] sm:$0xf]
  %v1593 = vld [vmem:[%s9 + $0x14] sm:$0xf]
  %v1594 = vld [vmem:[%s9 + $0x18] sm:$0xf]
  %v1595 = vld [vmem:[%s9 + $0x1c] sm:$0xf]
  %v1596 = vld [vmem:[%s9 + $0x20] sm:$0xf]
  %v1597 = vld [vmem:[%s9 + $0x24] sm:$0xf]
  %v1598 = vld [vmem:[%s9 + $0x28] sm:$0xf]
  %v1599 = vld [vmem:[%s9 + $0x2c] sm:$0xf]
  %v1600 = vld [vmem:[%s9 + $0x30] sm:$0xf]
  %v1601 = vld [vmem:[%s9 + $0x34] sm:$0xf]
  %v1602 = vld [vmem:[%s9 + $0x38] sm:$0xf]
  %v1603 = vld [vmem:[%s9 + $0x3c] sm:$0xf]
  %v1604 = vld [vmem:[%s9 + $0x40] sm:$0xf]
  %v1605 = vld [vmem:[%s9 + $0x44] sm:$0xf]
  %v1606 = vld [vmem:[%s9 + $0x48] sm:$0xf]
  %v1607 = vld [vmem:[%s9 + $0x4c] sm:$0xf]
  %v1608 = vld [vmem:[%s9 + $0x50] sm:$0xf]
  %v1609 = vld [vmem:[%s9 + $0x54] sm:$0xf]
  %v1610 = vld [vmem:[%s9 + $0x58] sm:$0xf]
  %v1611 = vld [vmem:[%s9 + $0x5c] sm:$0xf]
  %v1612 = vld [vmem:[%s9 + $0x60] sm:$0xf]
  %v1613 = vld [vmem:[%s9 + $0x64] sm:$0xf]
  %v1614 = vld [vmem:[%s9 + $0x68] sm:$0xf]
  %v1615 = vld [vmem:[%s9 + $0x6c] sm:$0xf]
  %v1616 = vld [vmem:[%s9 + $0x70] sm:$0xf]
  %v1617 = vld [vmem:[%s9 + $0x74] sm:$0xf]
  %v1618 = vld [vmem:[%s9 + $0x78] sm:$0xf]
  %v1619 = vld [vmem:[%s9 + $0x7c] sm:$0xf]
  %v1620 = vld [vmem:[%s10] sm:$0x1]
  %v1622 = vlaneseq
  %v1623 = vshrl.u32 %v1622, 7
  %v1624 = vsub.s32 0, %v1623
  %v1625 = vrot.slane %v1620, %v1624
  %v1659 = vunpack.c.l.b16 %v1588
  %v1660 = vunpack.c.l.b16 %v1589
  %v1661 = vunpack.c.l.b16 %v1590
  %v1662 = vunpack.c.l.b16 %v1591
  %v1663 = vunpack.c.l.b16 %v1592
  %v1664 = vunpack.c.l.b16 %v1593
  %v1665 = vunpack.c.l.b16 %v1594
  %v1666 = vunpack.c.l.b16 %v1595
  %v1667 = vunpack.c.l.b16 %v1596
  %v1668 = vunpack.c.l.b16 %v1597
  %v1669 = vunpack.c.l.b16 %v1598
  %v1670 = vunpack.c.l.b16 %v1599
  %v1671 = vunpack.c.l.b16 %v1600
  %v1672 = vunpack.c.l.b16 %v1601
  %v1673 = vunpack.c.l.b16 %v1602
  %v1674 = vunpack.c.l.b16 %v1603
  %v1675 = vunpack.c.l.b16 %v1604
  %v1676 = vunpack.c.l.b16 %v1605
  %v1677 = vunpack.c.l.b16 %v1606
  %v1678 = vunpack.c.l.b16 %v1607
  %v1679 = vunpack.c.l.b16 %v1608
  %v1680 = vunpack.c.l.b16 %v1609
  %v1681 = vunpack.c.l.b16 %v1610
  %v1682 = vunpack.c.l.b16 %v1611
  %v1683 = vunpack.c.l.b16 %v1612
  %v1684 = vunpack.c.l.b16 %v1613
  %v1685 = vunpack.c.l.b16 %v1614
  %v1686 = vunpack.c.l.b16 %v1615
  %v1687 = vunpack.c.l.b16 %v1616
  %v1688 = vunpack.c.l.b16 %v1617
  %v1689 = vunpack.c.l.b16 %v1618
  %v1690 = vunpack.c.l.b16 %v1619
  %v1691 = vpack.c.b16 %v1660, %v1659
  %v1692 = vpack.c.b16 %v1662, %v1661
  %v1693 = vpack.c.b16 %v1664, %v1663
  %v1694 = vpack.c.b16 %v1666, %v1665
  %v1695 = vpack.c.b16 %v1668, %v1667
  %v1696 = vpack.c.b16 %v1670, %v1669
  %v1697 = vpack.c.b16 %v1672, %v1671
  %v1698 = vpack.c.b16 %v1674, %v1673
  %v1699 = vpack.c.b16 %v1676, %v1675
  %v1700 = vpack.c.b16 %v1678, %v1677
  %v1701 = vpack.c.b16 %v1680, %v1679
  %v1702 = vpack.c.b16 %v1682, %v1681
  %v1703 = vpack.c.b16 %v1684, %v1683
  %v1704 = vpack.c.b16 %v1686, %v1685
  %v1705 = vpack.c.b16 %v1688, %v1687
  %v1706 = vpack.c.b16 %v1690, %v1689
  %1723 = vmatprep.subr.bf16.mxu0 0
  %1724 = vmatpush1.bf16.msra.mxu0 %v1691
  %1725 = vmatprep.subr.bf16.mxu0 0
  %1726 = vmatpush1.bf16.msra.mxu0 %v1692
  %1727 = vmatprep.subr.bf16.mxu0 0
  %1728 = vmatpush1.bf16.msra.mxu0 %v1693
  %1729 = vmatprep.subr.bf16.mxu0 0
  %1730 = vmatpush1.bf16.msra.mxu0 %v1694
  %1731 = vmatprep.subr.bf16.mxu0 0
  %1732 = vmatpush1.bf16.msra.mxu0 %v1695
  %1733 = vmatprep.subr.bf16.mxu0 0
  %1734 = vmatpush1.bf16.msra.mxu0 %v1696
  %1735 = vmatprep.subr.bf16.mxu0 0
  %1736 = vmatpush1.bf16.msra.mxu0 %v1697
  %1737 = vmatprep.subr.bf16.mxu0 0
  %1738 = vmatpush1.bf16.msra.mxu0 %v1698
  %1739 = vmatprep.subr.bf16.mxu0 0
  %1740 = vmatpush1.bf16.msra.mxu0 %v1699
  %1741 = vmatprep.subr.bf16.mxu0 0
  %1742 = vmatpush1.bf16.msra.mxu0 %v1700
  %1743 = vmatprep.subr.bf16.mxu0 0
  %1744 = vmatpush1.bf16.msra.mxu0 %v1701
  %1745 = vmatprep.subr.bf16.mxu0 0
  %1746 = vmatpush1.bf16.msra.mxu0 %v1702
  %1747 = vmatprep.subr.bf16.mxu0 0
  %1748 = vmatpush1.bf16.msra.mxu0 %v1703
  %1749 = vmatprep.subr.bf16.mxu0 0
  %1750 = vmatpush1.bf16.msra.mxu0 %v1704
  %1751 = vmatprep.subr.bf16.mxu0 0
  %1752 = vmatpush1.bf16.msra.mxu0 %v1705
  %1753 = vmatprep.subr.bf16.mxu0 0
  %1754 = vmatpush1.bf16.msra.mxu0 %v1706
  %1755 = vmatprep.mubr.bf16.mxu0 %v1587
  %1756 = vmatmul.mubr.bf16.gmra.mrb[0].mxu0 %v1586
  %v1757 = vpop.f32.mrb[0].mxu0
  %v1758 = vadd.f32 %v1625, %v1757
  %v1759 = vpop.f32.mrb[0].mxu0
  %v1760 = vpop.f32.mrb[0].mxu0
  %v1761 = vpop.f32.mrb[0].mxu0
  %1762 = vdwg.mxu0
  %v1763 = vmax.f32 %v1758, 0.0
  %v1764 = vld [vmem:[#allocation2] sm:$0x1]
  %v1765 = vld [vmem:[%s11] sm:$0xff]
  %v1766 = vld [vmem:[%s11 + $0x8] sm:$0xff]
  %v1767 = vld [vmem:[%s11 + $0x10] sm:$0xff]
  %v1768 = vld [vmem:[%s11 + $0x18] sm:$0xff]
  %v1769 = vld [vmem:[%s11 + $0x20] sm:$0xff]
  %v1770 = vld [vmem:[%s11 + $0x28] sm:$0xff]
  %v1771 = vld [vmem:[%s11 + $0x30] sm:$0xff]
  %v1772 = vld [vmem:[%s11 + $0x38] sm:$0xff]
  %v1773 = vld [vmem:[%s11 + $0x40] sm:$0xff]
  %v1774 = vld [vmem:[%s11 + $0x48] sm:$0xff]
  %v1775 = vld [vmem:[%s11 + $0x50] sm:$0xff]
  %v1776 = vld [vmem:[%s11 + $0x58] sm:$0xff]
  %v1777 = vld [vmem:[%s11 + $0x60] sm:$0xff]
  %v1778 = vld [vmem:[%s11 + $0x68] sm:$0xff]
  %v1779 = vld [vmem:[%s11 + $0x70] sm:$0xff]
  %v1780 = vld [vmem:[%s11 + $0x78] sm:$0xff]
  %v1781 = vld [vmem:[%s13] sm:$0x1]
  %v1783 = vlaneseq
  %v1784 = vshrl.u32 %v1783, 7
  %v1785 = vsub.s32 0, %v1784
  %v1786 = vrot.slane %v1781, %v1785
  %1788 = vmatprep.subr.mxu0 0.0
  %1789 = vmatpush1.msra.mxu0 %v1765
  %1790 = vmatprep.subr.mxu0 0.0
  %1791 = vmatpush1.msra.mxu0 %v1766
  %1792 = vmatprep.subr.mxu0 0.0
  %1793 = vmatpush1.msra.mxu0 %v1767
  %1794 = vmatprep.subr.mxu0 0.0
  %1795 = vmatpush1.msra.mxu0 %v1768
  %1796 = vmatprep.subr.mxu0 0.0
  %1797 = vmatpush1.msra.mxu0 %v1769
  %1798 = vmatprep.subr.mxu0 0.0
  %1799 = vmatpush1.msra.mxu0 %v1770
  %1800 = vmatprep.subr.mxu0 0.0
  %1801 = vmatpush1.msra.mxu0 %v1771
  %1802 = vmatprep.subr.mxu0 0.0
  %1803 = vmatpush1.msra.mxu0 %v1772
  %1804 = vmatprep.subr.mxu0 0.0
  %1805 = vmatpush1.msra.mxu0 %v1773
  %1806 = vmatprep.subr.mxu0 0.0
  %1807 = vmatpush1.msra.mxu0 %v1774
  %1808 = vmatprep.subr.mxu0 0.0
  %1809 = vmatpush1.msra.mxu0 %v1775
  %1810 = vmatprep.subr.mxu0 0.0
  %1811 = vmatpush1.msra.mxu0 %v1776
  %1812 = vmatprep.subr.mxu0 0.0
  %1813 = vmatpush1.msra.mxu0 %v1777
  %1814 = vmatprep.subr.mxu0 0.0
  %1815 = vmatpush1.msra.mxu0 %v1778
  %1816 = vmatprep.subr.mxu0 0.0
  %1817 = vmatpush1.msra.mxu0 %v1779
  %1818 = vmatprep.subr.mxu0 0.0
  %1819 = vmatpush1.msra.mxu0 %v1780
  %1820 = vmatprep.subr.mxu0 0.0
  %1821 = vmatpush1.msra.mxu0 0.0
  %1822 = vmatprep.subr.mxu0 0.0
  %1823 = vmatpush1.msra.mxu0 0.0
  %1824 = vmatprep.subr.mxu0 0.0
  %1825 = vmatpush1.msra.mxu0 0.0
  %1826 = vmatprep.subr.mxu0 0.0
  %1827 = vmatpush1.msra.mxu0 0.0
  %1828 = vmatprep.subr.mxu0 0.0
  %1829 = vmatpush1.msra.mxu0 0.0
  %1830 = vmatprep.subr.mxu0 0.0
  %1831 = vmatpush1.msra.mxu0 0.0
  %1832 = vmatprep.subr.mxu0 0.0
  %1833 = vmatpush1.msra.mxu0 0.0
  %1834 = vmatprep.subr.mxu0 0.0
  %1835 = vmatpush1.msra.mxu0 0.0
  %1836 = vmatprep.subr.mxu0 0.0
  %1837 = vmatpush1.msra.mxu0 0.0
  %1838 = vmatprep.subr.mxu0 0.0
  %1839 = vmatpush1.msra.mxu0 0.0
  %1840 = vmatprep.subr.mxu0 0.0
  %1841 = vmatpush1.msra.mxu0 0.0
  %1842 = vmatprep.subr.mxu0 0.0
  %1843 = vmatpush1.msra.mxu0 0.0
  %1844 = vmatprep.subr.mxu0 0.0
  %1845 = vmatpush1.msra.mxu0 0.0
  %1846 = vmatprep.subr.mxu0 0.0
  %1847 = vmatpush1.msra.mxu0 0.0
  %1848 = vmatprep.subr.mxu0 0.0
  %1849 = vmatpush1.msra.mxu0 0.0
  %1850 = vmatprep.subr.mxu0 0.0
  %1851 = vmatpush1.msra.mxu0 0.0
  %1852 = vmatprep.mubr.f32.mxu0 0.0
  %1853 = vmatmul.mubr.f32.gmra.mrb[0].mxu0 %v1763
  %v1854 = vpop.f32.mrb[0].mxu0
  %v1855 = vadd.f32 %v1786, %v1854
  %v1856 = vpop.f32.mrb[0].mxu0
  %1857 = vdwg.mxu0
  %v1858 = vld [vmem:[%s12] sm:$0x1]
  %1860 = vset.pattern.permute.xlu0 0
  %1861 = vperm.xlu0 %1860, %v1764
  %v1862 = vpop.permute.xlu0 %1861
  %v1864 = vlaneseq
  %v1865 = vshrl.u32 %v1864, 7
  %v1866 = vsub.s32 0, %v1865
  %v1867 = vrot.slane %v1862, %v1866
  %v1868 = vmul.f32 %v1867, %v1858
  %v1869 = vld [vmem:[%s14] sm:$0x1]
  %v1870 = vadd.f32 %v1868, %v1869
  %v1872 = vlaneseq
  %v1873 = vshrl.u32 %v1872, 7
  %v1874 = vsub.s32 0, %v1873
  %v1875 = vrot.slane %v1870, %v1874
  %v1877 = vadd.f32 %v1855, %v1875
  %v1878 = vxor.u32 %v1877, 2147483648
  %v1879 = vmul.f32 %v1878, 1.442695
  %v1880 = vpow.pop %v1879
  %v1881 = vadd.f32 %v1880, 1.0
  %v1882 = vrcp.pop %v1881
  %v1883 = vmul.f32 1.0, %v1882
  %1884 = vrot.lane.b32.xlu0 %v1875, 126
  %v1885 = vpop.permute.xlu0 %1884
  %v1887 = vmul.f32 %v1883, %v1885
  %1889 = vrot.lane.b32.xlu0 %v1887, 2
  %v1890 = vpop.permute.xlu0 %1889
  %v1892 = vadd.f32 %v1855, %v1890
  %v1893 = vtanh.pop %v1892
  %v1894 = vsub.f32 1.0, %v1883
  %1896 = vrot.lane.b32.xlu0 %v1893, 127
  %v1897 = vpop.permute.xlu0 %1896
  %v1899 = vmul.f32 %v1894, %v1897
  %v1900 = vlaneseq
  %v1901 = vshrl.u32 %v1900, 7
  %v1902 = vsub.s32 0, %v1901
  %v1903 = vrot.slane %v1764, %v1902
  %1904 = vrot.lane.b32.xlu0 %v1903, 1
  %v1905 = vpop.permute.xlu0 %1904
  %v1907 = vmul.f32 %v1883, %v1905
  %v1908 = vadd.f32 %v1899, %v1907
  %1910 = vset.pattern.permute.xlu0 1
  %1911 = vperm.xlu0 %1910, %v1908
  %v1912 = vpop.permute.xlu0 %1911
  %1914 = vst [vmem:[%s16] sm:$0xff] %v1763
  %1915 = vst [vmem:[%s16 + $0x8] sm:$0xff] %v1912
  // Predicated region
  $region66: #{net_forward.1} parent=0 // pred_check
    _
  $region67: #{net_forward.1} parent=0 // pred_check_branch
    %1917 = sbr.rel (0) target = $region69
  $region68: #{net_forward.1} parent=0 // pred_region
    _
  $region69: #{net_forward.1} parent=0 // pred_fallthru
    _
  // Predicated region
  $region70: #{net_forward.1} parent=0 // pred_check
    _
  $region71: #{net_forward.1} parent=0 // pred_check_branch
    %1919 = sbr.rel (0) target = $region73
  $region72: #{net_forward.1} parent=0 // pred_region
    _
  $region73: #{net_forward.1} parent=0 // pred_fallthru
    _

</llo_original>
